<compile_context>
chip_gen: v7x
topology: tpu7x:2x2x1
jax: 0.10.0
libtpu: 0.0.40
codegen_flags: <defaults>
</compile_context>

<pallas_src>
import jax
import jax.numpy as jnp
from jax.experimental import pallas as pl
from jax.experimental.pallas import tpu as pltpu

HIDDEN = 32
NUM_HEADS = 4
HEAD_DIM = HIDDEN // NUM_HEADS
FFN_DIM = 128
EPS = 1e-5
VEC_W = max(HIDDEN, 3 * HIDDEN // HIDDEN * HEAD_DIM, FFN_DIM)  # width of fused vector table
MXU_DTYPE = jnp.bfloat16   # set to jnp.float32 for a bit-accurate f32 MXU path

# fused vector-table row indices
_ROW_LN1_G, _ROW_LN1_B, _ROW_BO, _ROW_LN2_G, _ROW_LN2_B, _ROW_B2, _ROW_B1 = range(7)


# ----------------------------- fused Pallas kernel ------------------------------

def _opt_block_kernel(x_ref, mask_ref, vec_ref, bqkv_ref, wheads_ref, wo3_ref,
                      w1_ref, w2_ref, o_ref):
    S = x_ref.shape[1]
    H = HIDDEN

    x = x_ref[0]                     # (S, H)   f32
    mask = mask_ref[...]             # (S, S)   f32, shared across batch & heads

    # fused LN-gain / bias table (one VMEM ref instead of 8 tiny ones)
    ln1_g = vec_ref[_ROW_LN1_G:_ROW_LN1_G + 1, :H]
    ln1_b = vec_ref[_ROW_LN1_B:_ROW_LN1_B + 1, :H]
    bo    = vec_ref[_ROW_BO:_ROW_BO + 1, :H]
    ln2_g = vec_ref[_ROW_LN2_G:_ROW_LN2_G + 1, :H]
    ln2_b = vec_ref[_ROW_LN2_B:_ROW_LN2_B + 1, :H]
    b2    = vec_ref[_ROW_B2:_ROW_B2 + 1, :H]
    b1    = vec_ref[_ROW_B1:_ROW_B1 + 1, :FFN_DIM]

    def layernorm(v, g, b):
        mu = jnp.mean(v, axis=-1, keepdims=True)
        vc = v - mu
        var = jnp.mean(vc * vc, axis=-1, keepdims=True)
        return vc * jax.lax.rsqrt(var + EPS) * g + b

    # --- self-attention sub-block (pre-LN), all heads batched ---
    h = layernorm(x, ln1_g, ln1_b)                                      # (S, H) f32

    # per-head fused QKV projection: (nh, S, H) x (nh, H, 3d) -> (nh, S, 3d)
    # (1/sqrt(HEAD_DIM) is folded into the Q columns / bias at prep time)
    h_bc = jnp.broadcast_to(h.astype(MXU_DTYPE)[None], (NUM_HEADS, S, H))
    qkv = jnp.einsum("hsk,hkf->hsf", h_bc, wheads_ref[...],
                     preferred_element_type=jnp.float32) + bqkv_ref[...]  # (nh, S, 3d)
    q = qkv[:, :, :HEAD_DIM]
    k = qkv[:, :, HEAD_DIM:2 * HEAD_DIM]
    v = qkv[:, :, 2 * HEAD_DIM:]

    # scores / softmax / context: one head-batched MXU pass per stage
    s = jnp.einsum("hqd,hkd->hqk", q.astype(MXU_DTYPE), k.astype(MXU_DTYPE),
                   preferred_element_type=jnp.float32)                   # (nh, S, S)
    s = s + mask[None]
    s = s - jnp.max(s, axis=-1, keepdims=True)
    p = jnp.exp(s)
    p = p * pl.reciprocal(jnp.sum(p, axis=-1, keepdims=True), approx=True)
    ctx = jnp.einsum("hqk,hkd->hqd", p.astype(MXU_DTYPE), v.astype(MXU_DTYPE),
                     preferred_element_type=jnp.float32)                  # (nh, S, d)

    # out-projection with the head concat folded in: contract (head, d) against
    # Wo viewed as (nh, d, H) -> head-batched dot + head-sum (no lane concat).
    per_head = jnp.einsum("hsd,hdo->hso", ctx.astype(MXU_DTYPE), wo3_ref[...],
                          preferred_element_type=jnp.float32)             # (nh, S, H)
    attn_out = jnp.sum(per_head, axis=0) + bo + x                         # (S, H)

    # --- FFN sub-block (pre-LN) ---
    h2 = layernorm(attn_out, ln2_g, ln2_b)
    ff = jnp.maximum(
        jnp.dot(h2.astype(MXU_DTYPE), w1_ref[...],
                preferred_element_type=jnp.float32) + b1, 0.0)            # (S, FFN)
    out = (jnp.dot(ff.astype(MXU_DTYPE), w2_ref[...],
                   preferred_element_type=jnp.float32) + b2 + attn_out)   # (S, H)

    o_ref[0] = out


# ------------------------------ parameter prep -----------------------------------

def prepare_fused_params(params, mxu_dtype=MXU_DTYPE):
    """One-time prep: per-head fused QKV weights, scale folding, fused vector table."""
    nh, d, H = NUM_HEADS, HEAD_DIM, HIDDEN
    scale = d ** -0.5

    def per_head(w):                       # (H, H) -> (nh, H, d)
        return w.reshape(H, nh, d).transpose(1, 0, 2)

    w_heads = jnp.concatenate(
        [per_head(params["wq"] * scale), per_head(params["wk"]), per_head(params["wv"])],
        axis=-1).astype(mxu_dtype)                                        # (nh, H, 3d)
    bqkv_h = jnp.concatenate(
        [(params["bq"] * scale).reshape(nh, d),
         params["bk"].reshape(nh, d),
         params["bv"].reshape(nh, d)], axis=-1
    ).reshape(nh, 1, 3 * d).astype(jnp.float32)                           # (nh, 1, 3d)
    wo3 = params["wo"].reshape(nh, d, H).astype(mxu_dtype)                # (nh, d, H)

    def row(vname):
        v = params[vname].astype(jnp.float32)
        return jnp.pad(v, (0, VEC_W - v.shape[0]))

    vec = jnp.stack([row("ln1_g"), row("ln1_b"), row("bo"),
                     row("ln2_g"), row("ln2_b"), row("b2"), row("b1"),
                     jnp.zeros((VEC_W,), jnp.float32)])                   # (8, VEC_W)

    return {"vec": vec, "bqkv_h": bqkv_h, "w_heads": w_heads, "wo3": wo3,
            "w1": params["w1"].astype(mxu_dtype),
            "w2": params["w2"].astype(mxu_dtype)}


# ------------------------------ wrapper -----------------------------------------

def _vmem_spec():
    # whole array resident in VMEM: copied once, not re-DMA'd / double-buffered per step
    return pl.BlockSpec(memory_space=pltpu.MemorySpace.VMEM)


def opt_block_forward(fused, x, attention_mask):
    B, S, H = x.shape
    # shared additive mask (S, S) — broadcast over batch & heads (see TODO at top)
    mask2d = attention_mask.reshape(-1, S, S)[0]

    return pl.pallas_call(
        _opt_block_kernel,
        out_shape=jax.ShapeDtypeStruct((B, S, H), jnp.float32),
        grid=(B,),
        in_specs=[
            pl.BlockSpec((1, S, H), lambda b: (b, 0, 0)),   # x: only per-step DMA
            _vmem_spec(),   # mask (S, S)
            _vmem_spec(),   # fused vector table (8, VEC_W)
            _vmem_spec(),   # qkv bias (nh, 1, 3d)
            _vmem_spec(),   # w_heads (nh, H, 3d)
            _vmem_spec(),   # wo3 (nh, d, H)
            _vmem_spec(),   # w1 (H, FFN)
            _vmem_spec(),   # w2 (FFN, H)
        ],
        out_specs=pl.BlockSpec((1, S, H), lambda b: (b, 0, 0)),
        compiler_params=pltpu.CompilerParams(
            dimension_semantics=("parallel",),        # megacore split over batch (v7x)
            vmem_limit_bytes=32 * 1024 * 1024),
    )(x, mask2d, fused["vec"], fused["bqkv_h"], fused["w_heads"],
      fused["wo3"], fused["w1"], fused["w2"])


# ------------------------------ reference (pure JAX, f32) ------------------------

def opt_block_ref(params, x, attention_mask):
    B, S, H = x.shape

    def ln(v, g, b):
        mu = jnp.mean(v, -1, keepdims=True)
        var = jnp.mean((v - mu) ** 2, -1, keepdims=True)
        return (v - mu) * jax.lax.rsqrt(var + EPS) * g + b

    residual = x
    h = ln(x, params["ln1_g"], params["ln1_b"])
    q = (h @ params["wq"] + params["bq"]) * (HEAD_DIM ** -0.5)
    k = h @ params["wk"] + params["bk"]
    v = h @ params["wv"] + params["bv"]
    q = q.reshape(B, S, NUM_HEADS, HEAD_DIM).transpose(0, 2, 1, 3)
    k = k.reshape(B, S, NUM_HEADS, HEAD_DIM).transpose(0, 2, 1, 3)
    v = v.reshape(B, S, NUM_HEADS, HEAD_DIM).transpose(0, 2, 1, 3)
    s = jnp.einsum("bhqd,bhkd->bhqk", q, k) + attention_mask
    p = jax.nn.softmax(s, axis=-1)
    ctx = jnp.einsum("bhqk,bhkd->bhqd", p, v).transpose(0, 2, 1, 3).reshape(B, S, H)
    h = residual + (ctx @ params["wo"] + params["bo"])

    residual = h
    h2 = ln(h, params["ln2_g"], params["ln2_b"])
    h2 = jnp.maximum(h2 @ params["w1"] + params["b1"], 0.0)
    return residual + (h2 @ params["w2"] + params["b2"])


# ------------------------------ parameter init -----------------------------------

def init_params(key):
    ks = jax.random.split(key, 6)

    def dense(k, fi, fo):
        return jax.random.normal(k, (fi, fo), jnp.float32) * 0.02

    return {
        "ln1_g": jnp.ones((HIDDEN,), jnp.float32),
        "ln1_b": jnp.zeros((HIDDEN,), jnp.float32),
        "wq": dense(ks[0], HIDDEN, HIDDEN), "bq": jnp.zeros((HIDDEN,), jnp.float32),
        "wk": dense(ks[1], HIDDEN, HIDDEN), "bk": jnp.zeros((HIDDEN,), jnp.float32),
        "wv": dense(ks[2], HIDDEN, HIDDEN), "bv": jnp.zeros((HIDDEN,), jnp.float32),
        "wo": dense(ks[3], HIDDEN, HIDDEN), "bo": jnp.zeros((HIDDEN,), jnp.float32),
        "ln2_g": jnp.ones((HIDDEN,), jnp.float32),
        "ln2_b": jnp.zeros((HIDDEN,), jnp.float32),
        "w1": dense(ks[4], HIDDEN, FFN_DIM), "b1": jnp.zeros((FFN_DIM,), jnp.float32),
        "w2": dense(ks[5], FFN_DIM, HIDDEN), "b2": jnp.zeros((HIDDEN,), jnp.float32),
    }


if __name__ == "__main__":
    B, S = 2, 8
    key = jax.random.PRNGKey(0)
    k_params, k_x = jax.random.split(key)
    params = init_params(k_params)
    fused = prepare_fused_params(params)

    x = jax.random.normal(k_x, (B, S, HIDDEN), jnp.float32)
    # additive causal mask, (B, 1, S, S): 0 where attended, large-negative otherwise
    causal = jnp.tril(jnp.ones((S, S), jnp.float32))
    attention_mask = jnp.where(causal[None, None] > 0, 0.0, -1e9).astype(jnp.float32)
    attention_mask = jnp.broadcast_to(attention_mask, (B, 1, S, S))

    out = jax.block_until_ready(opt_block_forward(fused, x, attention_mask))
    ref = opt_block_ref(params, x, attention_mask)

    assert out.shape == (B, S, HIDDEN)
    # tolerance loosened vs the pure-f32 reference: bf16 MXU operands (~0.4% rel) plus
    # pl.reciprocal(approx=True) in the softmax denominator (flagged in review).
    max_err = float(jnp.max(jnp.abs(out - ref)))
    assert jnp.allclose(out, ref, atol=2e-2, rtol=2e-2), max_err

    print("KERNEL_OK")
</pallas_src>

<mosaic_0001>
module attributes {stable_mosaic.version = 11 : i64} {
  func.func @_opt_block_kernel(%arg0: i32, %arg1: memref<1x8x32xf32, #tpu.memory_space<vmem>>, %arg2: memref<8x8xf32, #tpu.memory_space<vmem>>, %arg3: memref<8x128xf32, #tpu.memory_space<vmem>>, %arg4: memref<4x1x24xf32, #tpu.memory_space<vmem>>, %arg5: memref<4x32x24xbf16, #tpu.memory_space<vmem>>, %arg6: memref<4x8x32xbf16, #tpu.memory_space<vmem>>, %arg7: memref<32x128xbf16, #tpu.memory_space<vmem>>, %arg8: memref<128x32xbf16, #tpu.memory_space<vmem>>, %arg9: memref<1x8x32xf32, #tpu.memory_space<vmem>>) attributes {dimension_semantics = [#tpu.dimension_semantics<parallel>], iteration_bounds = array<i64: 2>, scalar_prefetch = 0 : i64, scratch_operands = 0 : i64, tpu.core_type = #tpu.core_type<tc>, window_params = [{transform_indices = @transform_0, window_bounds = array<i64: 1, 8, 32>}, {pipeline_mode = #tpu.pipeline_mode<synchronous>, transform_indices = @transform_1, window_bounds = array<i64: 8, 8>}, {pipeline_mode = #tpu.pipeline_mode<synchronous>, transform_indices = @transform_2, window_bounds = array<i64: 8, 128>}, {pipeline_mode = #tpu.pipeline_mode<synchronous>, transform_indices = @transform_3, window_bounds = array<i64: 4, 1, 24>}, {pipeline_mode = #tpu.pipeline_mode<synchronous>, transform_indices = @transform_4, window_bounds = array<i64: 4, 32, 24>}, {pipeline_mode = #tpu.pipeline_mode<synchronous>, transform_indices = @transform_5, window_bounds = array<i64: 4, 8, 32>}, {pipeline_mode = #tpu.pipeline_mode<synchronous>, transform_indices = @transform_6, window_bounds = array<i64: 32, 128>}, {pipeline_mode = #tpu.pipeline_mode<synchronous>, transform_indices = @transform_7, window_bounds = array<i64: 128, 32>}, {transform_indices = @transform_8, window_bounds = array<i64: 1, 8, 32>}]} {
    %c0 = arith.constant 0 : index
    %c0_0 = arith.constant 0 : index
    %c0_1 = arith.constant 0 : index
    %0 = vector.load %arg1[%c0, %c0_0, %c0_1] : memref<1x8x32xf32, #tpu.memory_space<vmem>>, vector<1x8x32xf32>
    %1 = vector.shape_cast %0 : vector<1x8x32xf32> to vector<8x32xf32>
    %c0_2 = arith.constant 0 : index
    %c0_3 = arith.constant 0 : index
    %2 = vector.load %arg2[%c0_2, %c0_3] : memref<8x8xf32, #tpu.memory_space<vmem>>, vector<8x8xf32>
    %c0_4 = arith.constant 0 : index
    %c0_5 = arith.constant 0 : index
    %3 = vector.load %arg3[%c0_4, %c0_5] : memref<8x128xf32, #tpu.memory_space<vmem>>, vector<1x32xf32>
    %c1 = arith.constant 1 : index
    %c0_6 = arith.constant 0 : index
    %4 = vector.load %arg3[%c1, %c0_6] : memref<8x128xf32, #tpu.memory_space<vmem>>, vector<1x32xf32>
    %c2 = arith.constant 2 : index
    %c0_7 = arith.constant 0 : index
    %5 = vector.load %arg3[%c2, %c0_7] : memref<8x128xf32, #tpu.memory_space<vmem>>, vector<1x32xf32>
    %c3 = arith.constant 3 : index
    %c0_8 = arith.constant 0 : index
    %6 = vector.load %arg3[%c3, %c0_8] : memref<8x128xf32, #tpu.memory_space<vmem>>, vector<1x32xf32>
    %c4 = arith.constant 4 : index
    %c0_9 = arith.constant 0 : index
    %7 = vector.load %arg3[%c4, %c0_9] : memref<8x128xf32, #tpu.memory_space<vmem>>, vector<1x32xf32>
    %c5 = arith.constant 5 : index
    %c0_10 = arith.constant 0 : index
    %8 = vector.load %arg3[%c5, %c0_10] : memref<8x128xf32, #tpu.memory_space<vmem>>, vector<1x32xf32>
    %c6 = arith.constant 6 : index
    %c0_11 = arith.constant 0 : index
    %9 = vector.load %arg3[%c6, %c0_11] : memref<8x128xf32, #tpu.memory_space<vmem>>, vector<1x128xf32>
    %cst = arith.constant dense<0.000000e+00> : vector<8xf32>
    %10 = vector.multi_reduction <add>, %1, %cst [1] : vector<8x32xf32> to vector<8xf32>
    %11 = vector.shape_cast %10 : vector<8xf32> to vector<8x1xf32>
    %cst_12 = arith.constant 3.200000e+01 : f32
    %12 = vector.broadcast %cst_12 : f32 to vector<8x1xf32>
    %13 = arith.divf %11, %12 : vector<8x1xf32>
    %14 = vector.broadcast %13 : vector<8x1xf32> to vector<8x32xf32>
    %15 = arith.subf %1, %14 : vector<8x32xf32>
    %16 = arith.mulf %15, %15 : vector<8x32xf32>
    %cst_13 = arith.constant dense<0.000000e+00> : vector<8xf32>
    %17 = vector.multi_reduction <add>, %16, %cst_13 [1] : vector<8x32xf32> to vector<8xf32>
    %18 = vector.shape_cast %17 : vector<8xf32> to vector<8x1xf32>
    %cst_14 = arith.constant 3.200000e+01 : f32
    %19 = vector.broadcast %cst_14 : f32 to vector<8x1xf32>
    %20 = arith.divf %18, %19 : vector<8x1xf32>
    %cst_15 = arith.constant 9.99999974E-6 : f32
    %21 = vector.broadcast %cst_15 : f32 to vector<8x1xf32>
    %22 = arith.addf %20, %21 : vector<8x1xf32>
    %23 = math.rsqrt %22 : vector<8x1xf32>
    %24 = vector.broadcast %23 : vector<8x1xf32> to vector<8x32xf32>
    %25 = arith.mulf %15, %24 : vector<8x32xf32>
    %26 = vector.broadcast %3 : vector<1x32xf32> to vector<8x32xf32>
    %27 = arith.mulf %25, %26 : vector<8x32xf32>
    %28 = vector.broadcast %4 : vector<1x32xf32> to vector<8x32xf32>
    %29 = arith.addf %27, %28 : vector<8x32xf32>
    %30 = arith.truncf %29 : vector<8x32xf32> to vector<8x32xbf16>
    %31 = vector.shape_cast %30 : vector<8x32xbf16> to vector<1x8x32xbf16>
    %32 = vector.shape_cast %31 : vector<1x8x32xbf16> to vector<1x8x32xbf16>
    %33 = vector.broadcast %32 : vector<1x8x32xbf16> to vector<4x8x32xbf16>
    %c0_16 = arith.constant 0 : index
    %c0_17 = arith.constant 0 : index
    %c0_18 = arith.constant 0 : index
    %34 = vector.load %arg5[%c0_16, %c0_17, %c0_18] : memref<4x32x24xbf16, #tpu.memory_space<vmem>>, vector<4x32x24xbf16>
    "tpu.trace_start"() <{level = 10 : i32, message = "hsk,hkf->hsf"}> : () -> ()
    %cst_19 = arith.constant dense<0.000000e+00> : vector<4x8x24xf32>
    %35 = tpu.matmul %33, %34, %cst_19 {dimension_numbers = #tpu.dot_dimension_numbers<[2], [1], [1], [2], [0, 0, 0, 1, 1, 2], [0], [0]>} : vector<4x8x32xbf16>, vector<4x32x24xbf16>, vector<4x8x24xf32> -> vector<4x8x24xf32>
    "tpu.trace_stop"() : () -> ()
    %c0_20 = arith.constant 0 : index
    %c0_21 = arith.constant 0 : index
    %c0_22 = arith.constant 0 : index
    %36 = vector.load %arg4[%c0_20, %c0_21, %c0_22] : memref<4x1x24xf32, #tpu.memory_space<vmem>>, vector<4x1x24xf32>
    %37 = vector.broadcast %36 : vector<4x1x24xf32> to vector<4x8x24xf32>
    %38 = arith.addf %35, %37 : vector<4x8x24xf32>
    %39 = vector.extract_strided_slice %38 {offsets = [0, 0, 0], sizes = [4, 8, 8], strides = [1, 1, 1]} : vector<4x8x24xf32> to vector<4x8x8xf32>
    %40 = vector.extract_strided_slice %38 {offsets = [0, 0, 8], sizes = [4, 8, 8], strides = [1, 1, 1]} : vector<4x8x24xf32> to vector<4x8x8xf32>
    %41 = vector.extract_strided_slice %38 {offsets = [0, 0, 16], sizes = [4, 8, 8], strides = [1, 1, 1]} : vector<4x8x24xf32> to vector<4x8x8xf32>
    %42 = arith.truncf %39 : vector<4x8x8xf32> to vector<4x8x8xbf16>
    %43 = arith.truncf %40 : vector<4x8x8xf32> to vector<4x8x8xbf16>
    "tpu.trace_start"() <{level = 10 : i32, message = "hqd,hkd->hqk"}> : () -> ()
    %cst_23 = arith.constant dense<0.000000e+00> : vector<4x8x8xf32>
    %44 = tpu.matmul %42, %43, %cst_23 {dimension_numbers = #tpu.dot_dimension_numbers<[2], [2], [1], [1], [0, 0, 0, 1, 1, 1], [0], [0]>} : vector<4x8x8xbf16>, vector<4x8x8xbf16>, vector<4x8x8xf32> -> vector<4x8x8xf32>
    "tpu.trace_stop"() : () -> ()
    %45 = vector.shape_cast %2 : vector<8x8xf32> to vector<1x8x8xf32>
    %46 = vector.broadcast %45 : vector<1x8x8xf32> to vector<4x8x8xf32>
    %47 = arith.addf %44, %46 : vector<4x8x8xf32>
    %cst_24 = arith.constant dense<0xFF800000> : vector<4x8xf32>
    %48 = vector.multi_reduction <maximumf>, %47, %cst_24 [2] : vector<4x8x8xf32> to vector<4x8xf32>
    %49 = vector.shape_cast %48 : vector<4x8xf32> to vector<4x8x1xf32>
    %50 = vector.broadcast %49 : vector<4x8x1xf32> to vector<4x8x8xf32>
    %51 = arith.subf %47, %50 : vector<4x8x8xf32>
    %52 = math.exp %51 : vector<4x8x8xf32>
    %cst_25 = arith.constant dense<0.000000e+00> : vector<4x8xf32>
    %53 = vector.multi_reduction <add>, %52, %cst_25 [2] : vector<4x8x8xf32> to vector<4x8xf32>
    %54 = vector.shape_cast %53 : vector<4x8xf32> to vector<4x8x1xf32>
    %55 = tpu.reciprocal %54 {approx = true} : vector<4x8x1xf32> -> vector<4x8x1xf32>
    %56 = vector.broadcast %55 : vector<4x8x1xf32> to vector<4x8x8xf32>
    %57 = arith.mulf %52, %56 : vector<4x8x8xf32>
    %58 = arith.truncf %57 : vector<4x8x8xf32> to vector<4x8x8xbf16>
    %59 = arith.truncf %41 : vector<4x8x8xf32> to vector<4x8x8xbf16>
    "tpu.trace_start"() <{level = 10 : i32, message = "hqk,hkd->hqd"}> : () -> ()
    %cst_26 = arith.constant dense<0.000000e+00> : vector<4x8x8xf32>
    %60 = tpu.matmul %58, %59, %cst_26 {dimension_numbers = #tpu.dot_dimension_numbers<[2], [1], [1], [2], [0, 0, 0, 1, 1, 2], [0], [0]>} : vector<4x8x8xbf16>, vector<4x8x8xbf16>, vector<4x8x8xf32> -> vector<4x8x8xf32>
    "tpu.trace_stop"() : () -> ()
    %61 = arith.truncf %60 : vector<4x8x8xf32> to vector<4x8x8xbf16>
    %c0_27 = arith.constant 0 : index
    %c0_28 = arith.constant 0 : index
    %c0_29 = arith.constant 0 : index
    %62 = vector.load %arg6[%c0_27, %c0_28, %c0_29] : memref<4x8x32xbf16, #tpu.memory_space<vmem>>, vector<4x8x32xbf16>
    "tpu.trace_start"() <{level = 10 : i32, message = "hsd,hdo->hso"}> : () -> ()
    %cst_30 = arith.constant dense<0.000000e+00> : vector<4x8x32xf32>
    %63 = tpu.matmul %61, %62, %cst_30 {dimension_numbers = #tpu.dot_dimension_numbers<[2], [1], [1], [2], [0, 0, 0, 1, 1, 2], [0], [0]>} : vector<4x8x8xbf16>, vector<4x8x32xbf16>, vector<4x8x32xf32> -> vector<4x8x32xf32>
    "tpu.trace_stop"() : () -> ()
    %cst_31 = arith.constant dense<0.000000e+00> : vector<8x32xf32>
    %64 = vector.multi_reduction <add>, %63, %cst_31 [0] : vector<4x8x32xf32> to vector<8x32xf32>
    %65 = vector.broadcast %5 : vector<1x32xf32> to vector<8x32xf32>
    %66 = arith.addf %64, %65 : vector<8x32xf32>
    %67 = arith.addf %66, %1 : vector<8x32xf32>
    %cst_32 = arith.constant dense<0.000000e+00> : vector<8xf32>
    %68 = vector.multi_reduction <add>, %67, %cst_32 [1] : vector<8x32xf32> to vector<8xf32>
    %69 = vector.shape_cast %68 : vector<8xf32> to vector<8x1xf32>
    %cst_33 = arith.constant 3.200000e+01 : f32
    %70 = vector.broadcast %cst_33 : f32 to vector<8x1xf32>
    %71 = arith.divf %69, %70 : vector<8x1xf32>
    %72 = vector.broadcast %71 : vector<8x1xf32> to vector<8x32xf32>
    %73 = arith.subf %67, %72 : vector<8x32xf32>
    %74 = arith.mulf %73, %73 : vector<8x32xf32>
    %cst_34 = arith.constant dense<0.000000e+00> : vector<8xf32>
    %75 = vector.multi_reduction <add>, %74, %cst_34 [1] : vector<8x32xf32> to vector<8xf32>
    %76 = vector.shape_cast %75 : vector<8xf32> to vector<8x1xf32>
    %cst_35 = arith.constant 3.200000e+01 : f32
    %77 = vector.broadcast %cst_35 : f32 to vector<8x1xf32>
    %78 = arith.divf %76, %77 : vector<8x1xf32>
    %cst_36 = arith.constant 9.99999974E-6 : f32
    %79 = vector.broadcast %cst_36 : f32 to vector<8x1xf32>
    %80 = arith.addf %78, %79 : vector<8x1xf32>
    %81 = math.rsqrt %80 : vector<8x1xf32>
    %82 = vector.broadcast %81 : vector<8x1xf32> to vector<8x32xf32>
    %83 = arith.mulf %73, %82 : vector<8x32xf32>
    %84 = vector.broadcast %6 : vector<1x32xf32> to vector<8x32xf32>
    %85 = arith.mulf %83, %84 : vector<8x32xf32>
    %86 = vector.broadcast %7 : vector<1x32xf32> to vector<8x32xf32>
    %87 = arith.addf %85, %86 : vector<8x32xf32>
    %88 = arith.truncf %87 : vector<8x32xf32> to vector<8x32xbf16>
    %c0_37 = arith.constant 0 : index
    %c0_38 = arith.constant 0 : index
    %89 = vector.load %arg7[%c0_37, %c0_38] : memref<32x128xbf16, #tpu.memory_space<vmem>>, vector<32x128xbf16>
    %cst_39 = arith.constant dense<0.000000e+00> : vector<8x128xf32>
    %90 = tpu.matmul %88, %89, %cst_39 {dimension_numbers = #tpu.dot_dimension_numbers<[1], [0], [0], [1], [0, 0, 1, 1], [], []>} : vector<8x32xbf16>, vector<32x128xbf16>, vector<8x128xf32> -> vector<8x128xf32>
    %91 = vector.broadcast %9 : vector<1x128xf32> to vector<8x128xf32>
    %92 = arith.addf %90, %91 : vector<8x128xf32>
    %cst_40 = arith.constant 0.000000e+00 : f32
    %93 = vector.broadcast %cst_40 : f32 to vector<8x128xf32>
    %94 = arith.maximumf %92, %93 : vector<8x128xf32>
    %95 = arith.truncf %94 : vector<8x128xf32> to vector<8x128xbf16>
    %c0_41 = arith.constant 0 : index
    %c0_42 = arith.constant 0 : index
    %96 = vector.load %arg8[%c0_41, %c0_42] : memref<128x32xbf16, #tpu.memory_space<vmem>>, vector<128x32xbf16>
    %cst_43 = arith.constant dense<0.000000e+00> : vector<8x32xf32>
    %97 = tpu.matmul %95, %96, %cst_43 {dimension_numbers = #tpu.dot_dimension_numbers<[1], [0], [0], [1], [0, 0, 1, 1], [], []>} : vector<8x128xbf16>, vector<128x32xbf16>, vector<8x32xf32> -> vector<8x32xf32>
    %98 = vector.broadcast %8 : vector<1x32xf32> to vector<8x32xf32>
    %99 = arith.addf %97, %98 : vector<8x32xf32>
    %100 = arith.addf %99, %67 : vector<8x32xf32>
    %c0_44 = arith.constant 0 : index
    %c0_45 = arith.constant 0 : index
    %c0_46 = arith.constant 0 : index
    %101 = vector.load %arg9[%c0_44, %c0_45, %c0_46] : memref<1x8x32xf32, #tpu.memory_space<vmem>>, vector<1x8x32xf32>
    %102 = vector.shape_cast %101 : vector<1x8x32xf32> to vector<8x32xf32>
    %103 = vector.shape_cast %100 : vector<8x32xf32> to vector<1x8x32xf32>
    tpu.vector_store %arg9[%c0_44, %c0_45, %c0_46], %103 {strides = array<i32>} : memref<1x8x32xf32, #tpu.memory_space<vmem>>, vector<1x8x32xf32>,
    return
  }
  func.func @transform_0(%arg0: i32) -> (i32, i32, i32) {
    %c0_i32 = arith.constant 0 : i32
    %c0_i32_0 = arith.constant 0 : i32
    %c0_i32_1 = arith.constant 0 : i32
    return %arg0, %c0_i32, %c0_i32_0 : i32, i32, i32
  }
  func.func @transform_1(%arg0: i32) -> (i32, i32) {
    %c0_i32 = arith.constant 0 : i32
    %c0_i32_0 = arith.constant 0 : i32
    %c0_i32_1 = arith.constant 0 : i32
    return %c0_i32, %c0_i32_0 : i32, i32
  }
  func.func @transform_2(%arg0: i32) -> (i32, i32) {
    %c0_i32 = arith.constant 0 : i32
    %c0_i32_0 = arith.constant 0 : i32
    %c0_i32_1 = arith.constant 0 : i32
    return %c0_i32, %c0_i32_0 : i32, i32
  }
  func.func @transform_3(%arg0: i32) -> (i32, i32, i32) {
    %c0_i32 = arith.constant 0 : i32
    %c0_i32_0 = arith.constant 0 : i32
    %c0_i32_1 = arith.constant 0 : i32
    %c0_i32_2 = arith.constant 0 : i32
    return %c0_i32, %c0_i32_0, %c0_i32_1 : i32, i32, i32
  }
  func.func @transform_4(%arg0: i32) -> (i32, i32, i32) {
    %c0_i32 = arith.constant 0 : i32
    %c0_i32_0 = arith.constant 0 : i32
    %c0_i32_1 = arith.constant 0 : i32
    %c0_i32_2 = arith.constant 0 : i32
    return %c0_i32, %c0_i32_0, %c0_i32_1 : i32, i32, i32
  }
  func.func @transform_5(%arg0: i32) -> (i32, i32, i32) {
    %c0_i32 = arith.constant 0 : i32
    %c0_i32_0 = arith.constant 0 : i32
    %c0_i32_1 = arith.constant 0 : i32
    %c0_i32_2 = arith.constant 0 : i32
    return %c0_i32, %c0_i32_0, %c0_i32_1 : i32, i32, i32
  }
  func.func @transform_6(%arg0: i32) -> (i32, i32) {
    %c0_i32 = arith.constant 0 : i32
    %c0_i32_0 = arith.constant 0 : i32
    %c0_i32_1 = arith.constant 0 : i32
    return %c0_i32, %c0_i32_0 : i32, i32
  }
  func.func @transform_7(%arg0: i32) -> (i32, i32) {
    %c0_i32 = arith.constant 0 : i32
    %c0_i32_0 = arith.constant 0 : i32
    %c0_i32_1 = arith.constant 0 : i32
    return %c0_i32, %c0_i32_0 : i32, i32
  }
  func.func @transform_8(%arg0: i32) -> (i32, i32, i32) {
    %c0_i32 = arith.constant 0 : i32
    %c0_i32_0 = arith.constant 0 : i32
    %c0_i32_1 = arith.constant 0 : i32
    return %arg0, %c0_i32, %c0_i32_0 : i32, i32, i32
  }
}

</mosaic_0001>

<llo_original>
// kernel: tpu_custom_call.1
$region0: #{tpu_custom_call.1}
  #allocation0 [shape = 'u32[]', space=smem, size = 0x4, offset = 0x4, fixed_abs, tag = 'smem constant byte address 0x4 - core index']
  #allocation1 [shape = 'u32[144,128]{1,0:T(1,128)}', space=vmem, size = 0x12000, scoped, tag = 'internal scratch']
  %s0 = inlined_call_operand.vmem [shape: f32[2,8,32], index: 0, kind: input, shape index: {}]
  %s1 = inlined_call_operand.vmem [shape: f32[8,8], index: 1, kind: input, shape index: {}]
  %s2 = inlined_call_operand.vmem [shape: f32[8,128], index: 2, kind: input, shape index: {}]
  %s3 = inlined_call_operand.vmem [shape: f32[4,1,24], index: 3, kind: input, shape index: {}]
  %s4 = inlined_call_operand.vmem [shape: bf16[4,32,24], index: 4, kind: input, shape index: {}]
  %s5 = inlined_call_operand.vmem [shape: bf16[4,8,32], index: 5, kind: input, shape index: {}]
  %s6 = inlined_call_operand.vmem [shape: bf16[32,128], index: 6, kind: input, shape index: {}]
  %s7 = inlined_call_operand.vmem [shape: bf16[128,32], index: 7, kind: input, shape index: {}]
  %s8 = inlined_call_operand.hbm [shape: f32[2,8,32], index: 8, kind: output, shape index: {}]
  %s9 = sld [smem:[#allocation0]]
  $region65: #{tpu_custom_call.1} parent=0
    _
  %s11 = ssub.s32 1, %s9
  %s12 = scalar_select 0, %s11, %s9
  $region1: #{tpu_custom_call.1} parent=0
    #allocation2 [shape = 'u8[8192]{0}', space=vmem, size = 0x2000, scoped, tag = 'output window, operand 0']
    #allocation3 [shape = 's32[2]{0}', space=sflag, size = 0x8, scoped, tag = 'scoped memory for tpu_custom_call.1']
    %13 = vsyncpa [#allocation3], 0
    %s14 = scalar_lea.sflag [#allocation3], 1
    %15 = vsyncpa %s14, 0
    loop: start=0, step=1, limit=4
    $region2: #{tpu_custom_call.1} parent=1 // loop_pre_header
      _
    $region3: #{tpu_custom_call.1} parent=1 // loop_header
      %s17 = sphi 0, %s21
      %p18 = scmp.ge.s32.totalorder %s17, 4
      %s27 = sphi 0, %s29
      %s30 = sphi 0, %s27
      %s31 = sphi 0, %s30
      %s47 = sphi 0, %s31
      %s51 = sphi 0, %s51
      %s53 = sphi 0, %s51
      %s54 = sphi 0, %s53
      %s68 = sphi 0, %s54
      %s72 = sphi 0, %s72
      %s74 = sphi 0, %s72
      %s75 = sphi 0, %s74
      %s89 = sphi 0, %s75
      %s93 = sphi 0, %s93
      %s95 = sphi 0, %s93
      %s96 = sphi 0, %s95
      %s110 = sphi 0, %s96
      %s114 = sphi 0, %s114
      %s116 = sphi 0, %s114
      %s117 = sphi 0, %s116
      %s131 = sphi 0, %s117
      %s135 = sphi 0, %s135
      %s137 = sphi 0, %s135
      %s138 = sphi 0, %s137
      %s152 = sphi 0, %s138
      %s156 = sphi 0, %s156
      %s158 = sphi 0, %s156
      %s159 = sphi 0, %s158
      %s173 = sphi 0, %s159
      %s177 = sphi 0, %s177
      %s179 = sphi 0, %s177
      %s180 = sphi 0, %s179
      %s194 = sphi 0, %s180
      %s200 = sphi 0, %s202
      %s203 = sphi 0, %s200
      %s204 = sphi 0, %s203
      %s220 = sphi 0, %s204
    $region4: #{tpu_custom_call.1} parent=1 // loop_header_branch
      %20 = sbr.rel (%p18) target = $region8
    $region5: #{tpu_custom_call.1} parent=1 // loop_body
      %s22 = ssub.s32 %s17, 1
      %s23 = ssub.s32 %s17, 2
      %s24 = sadd.s32 %s17, 1
      %s25 = ssub.s32 %s17, %s24
      %p26 = scmp.eq.s32.totalorder %s25, 0
      %s28 = sadd.s32 %s27, 1
      %s29 = scalar_select %p26, %s27, %s28
      %p32 = pneg %p26
      %p33 = scmp.eq.s32.totalorder %s17, 1
      %p34 = por %p32, %p33
      %p35 = scmp.ne.s32.totalorder %s27, %s30
      %p36 = scmp.eq.s32.totalorder %s17, 0
      %p37 = por %p35, %p36
      %p38 = scmp.ne.s32.totalorder %s27, %s30
      %p39 = scmp.eq.s32.totalorder %s22, 1
      %p40 = por %p38, %p39
      %p41 = scmp.ne.s32.totalorder %s30, %s31
      %p42 = scmp.eq.s32.totalorder %s22, 0
      %p43 = por %p41, %p42
      %p44 = scmp.ne.s32.totalorder %s30, %s31
      %p45 = scmp.eq.s32.totalorder %s23, 1
      %p46 = por %p44, %p45
      %p48 = scmp.ne.s32.totalorder %s31, %s47
      %p49 = scmp.eq.s32.totalorder %s23, 0
      %p50 = por %p48, %p49
      %s52 = sadd.s32 %s51, 1
      %p55 = scmp.eq.s32.totalorder %s17, 1
      %p56 = scmp.ne.s32.totalorder %s51, %s53
      %p57 = scmp.eq.s32.totalorder %s17, 0
      %p58 = por %p56, %p57
      %p59 = scmp.ne.s32.totalorder %s51, %s53
      %p60 = scmp.eq.s32.totalorder %s22, 1
      %p61 = por %p59, %p60
      %p62 = scmp.ne.s32.totalorder %s53, %s54
      %p63 = scmp.eq.s32.totalorder %s22, 0
      %p64 = por %p62, %p63
      %p65 = scmp.ne.s32.totalorder %s53, %s54
      %p66 = scmp.eq.s32.totalorder %s23, 1
      %p67 = por %p65, %p66
      %p69 = scmp.ne.s32.totalorder %s54, %s68
      %p70 = scmp.eq.s32.totalorder %s23, 0
      %p71 = por %p69, %p70
      %s73 = sadd.s32 %s72, 1
      %p76 = scmp.eq.s32.totalorder %s17, 1
      %p77 = scmp.ne.s32.totalorder %s72, %s74
      %p78 = scmp.eq.s32.totalorder %s17, 0
      %p79 = por %p77, %p78
      %p80 = scmp.ne.s32.totalorder %s72, %s74
      %p81 = scmp.eq.s32.totalorder %s22, 1
      %p82 = por %p80, %p81
      %p83 = scmp.ne.s32.totalorder %s74, %s75
      %p84 = scmp.eq.s32.totalorder %s22, 0
      %p85 = por %p83, %p84
      %p86 = scmp.ne.s32.totalorder %s74, %s75
      %p87 = scmp.eq.s32.totalorder %s23, 1
      %p88 = por %p86, %p87
      %p90 = scmp.ne.s32.totalorder %s75, %s89
      %p91 = scmp.eq.s32.totalorder %s23, 0
      %p92 = por %p90, %p91
      %s94 = sadd.s32 %s93, 1
      %p97 = scmp.eq.s32.totalorder %s17, 1
      %p98 = scmp.ne.s32.totalorder %s93, %s95
      %p99 = scmp.eq.s32.totalorder %s17, 0
      %p100 = por %p98, %p99
      %p101 = scmp.ne.s32.totalorder %s93, %s95
      %p102 = scmp.eq.s32.totalorder %s22, 1
      %p103 = por %p101, %p102
      %p104 = scmp.ne.s32.totalorder %s95, %s96
      %p105 = scmp.eq.s32.totalorder %s22, 0
      %p106 = por %p104, %p105
      %p107 = scmp.ne.s32.totalorder %s95, %s96
      %p108 = scmp.eq.s32.totalorder %s23, 1
      %p109 = por %p107, %p108
      %p111 = scmp.ne.s32.totalorder %s96, %s110
      %p112 = scmp.eq.s32.totalorder %s23, 0
      %p113 = por %p111, %p112
      %s115 = sadd.s32 %s114, 1
      %p118 = scmp.eq.s32.totalorder %s17, 1
      %p119 = scmp.ne.s32.totalorder %s114, %s116
      %p120 = scmp.eq.s32.totalorder %s17, 0
      %p121 = por %p119, %p120
      %p122 = scmp.ne.s32.totalorder %s114, %s116
      %p123 = scmp.eq.s32.totalorder %s22, 1
      %p124 = por %p122, %p123
      %p125 = scmp.ne.s32.totalorder %s116, %s117
      %p126 = scmp.eq.s32.totalorder %s22, 0
      %p127 = por %p125, %p126
      %p128 = scmp.ne.s32.totalorder %s116, %s117
      %p129 = scmp.eq.s32.totalorder %s23, 1
      %p130 = por %p128, %p129
      %p132 = scmp.ne.s32.totalorder %s117, %s131
      %p133 = scmp.eq.s32.totalorder %s23, 0
      %p134 = por %p132, %p133
      %s136 = sadd.s32 %s135, 1
      %p139 = scmp.eq.s32.totalorder %s17, 1
      %p140 = scmp.ne.s32.totalorder %s135, %s137
      %p141 = scmp.eq.s32.totalorder %s17, 0
      %p142 = por %p140, %p141
      %p143 = scmp.ne.s32.totalorder %s135, %s137
      %p144 = scmp.eq.s32.totalorder %s22, 1
      %p145 = por %p143, %p144
      %p146 = scmp.ne.s32.totalorder %s137, %s138
      %p147 = scmp.eq.s32.totalorder %s22, 0
      %p148 = por %p146, %p147
      %p149 = scmp.ne.s32.totalorder %s137, %s138
      %p150 = scmp.eq.s32.totalorder %s23, 1
      %p151 = por %p149, %p150
      %p153 = scmp.ne.s32.totalorder %s138, %s152
      %p154 = scmp.eq.s32.totalorder %s23, 0
      %p155 = por %p153, %p154
      %s157 = sadd.s32 %s156, 1
      %p160 = scmp.eq.s32.totalorder %s17, 1
      %p161 = scmp.ne.s32.totalorder %s156, %s158
      %p162 = scmp.eq.s32.totalorder %s17, 0
      %p163 = por %p161, %p162
      %p164 = scmp.ne.s32.totalorder %s156, %s158
      %p165 = scmp.eq.s32.totalorder %s22, 1
      %p166 = por %p164, %p165
      %p167 = scmp.ne.s32.totalorder %s158, %s159
      %p168 = scmp.eq.s32.totalorder %s22, 0
      %p169 = por %p167, %p168
      %p170 = scmp.ne.s32.totalorder %s158, %s159
      %p171 = scmp.eq.s32.totalorder %s23, 1
      %p172 = por %p170, %p171
      %p174 = scmp.ne.s32.totalorder %s159, %s173
      %p175 = scmp.eq.s32.totalorder %s23, 0
      %p176 = por %p174, %p175
      %s178 = sadd.s32 %s177, 1
      %p181 = scmp.eq.s32.totalorder %s17, 1
      %p182 = scmp.ne.s32.totalorder %s177, %s179
      %p183 = scmp.eq.s32.totalorder %s17, 0
      %p184 = por %p182, %p183
      %p185 = scmp.ne.s32.totalorder %s177, %s179
      %p186 = scmp.eq.s32.totalorder %s22, 1
      %p187 = por %p185, %p186
      %p188 = scmp.ne.s32.totalorder %s179, %s180
      %p189 = scmp.eq.s32.totalorder %s22, 0
      %p190 = por %p188, %p189
      %p191 = scmp.ne.s32.totalorder %s179, %s180
      %p192 = scmp.eq.s32.totalorder %s23, 1
      %p193 = por %p191, %p192
      %p195 = scmp.ne.s32.totalorder %s180, %s194
      %p196 = scmp.eq.s32.totalorder %s23, 0
      %p197 = por %p195, %p196
      %s198 = ssub.s32 %s17, %s24
      %p199 = scmp.eq.s32.totalorder %s198, 0
      %s201 = sadd.s32 %s200, 1
      %s202 = scalar_select %p199, %s200, %s201
      %p205 = pneg %p199
      %p206 = scmp.eq.s32.totalorder %s17, 1
      %p207 = por %p205, %p206
      %p208 = scmp.ne.s32.totalorder %s200, %s203
      %p209 = scmp.eq.s32.totalorder %s17, 0
      %p210 = por %p208, %p209
      %p211 = scmp.ne.s32.totalorder %s200, %s203
      %p212 = scmp.eq.s32.totalorder %s22, 1
      %p213 = por %p211, %p212
      %p214 = scmp.ne.s32.totalorder %s203, %s204
      %p215 = scmp.eq.s32.totalorder %s22, 0
      %p216 = por %p214, %p215
      %p217 = scmp.ne.s32.totalorder %s203, %s204
      %p218 = scmp.eq.s32.totalorder %s23, 1
      %p219 = por %p217, %p218
      %p221 = scmp.ne.s32.totalorder %s204, %s220
      %p222 = scmp.eq.s32.totalorder %s23, 0
      %p223 = por %p221, %p222
      %p224 = scmp.le.s32.totalorder 1, %s17
      %p225 = scmp.lt.s32.totalorder %s17, 3
      %p226 = pnand %p224, %p225
      %p227 = pneg %p226
      // Predicated region
      $region9: #{tpu_custom_call.1} parent=5 // pred_check
        _
      $region10: #{tpu_custom_call.1} parent=5 // pred_check_branch
        %229 = sbr.rel (%p226) target = $region12
      $region11: #{tpu_custom_call.1} parent=5 // pred_region
        %s230 = ssub.s32 %s17, 1
        // Predicated region
        $region13: #{tpu_custom_call.1} parent=11 // pred_check
          %p231 = pneg %p64
        $region14: #{tpu_custom_call.1} parent=11 // pred_check_branch
          %233 = sbr.rel (%p231) target = $region16
        $region15: #{tpu_custom_call.1} parent=11 // pred_region
          _
        $region16: #{tpu_custom_call.1} parent=11 // pred_fallthru
          _
        // Predicated region
        $region17: #{tpu_custom_call.1} parent=11 // pred_check
          %p234 = pneg %p85
        $region18: #{tpu_custom_call.1} parent=11 // pred_check_branch
          %236 = sbr.rel (%p234) target = $region20
        $region19: #{tpu_custom_call.1} parent=11 // pred_region
          _
        $region20: #{tpu_custom_call.1} parent=11 // pred_fallthru
          _
        // Predicated region
        $region21: #{tpu_custom_call.1} parent=11 // pred_check
          %p237 = pneg %p106
        $region22: #{tpu_custom_call.1} parent=11 // pred_check_branch
          %239 = sbr.rel (%p237) target = $region24
        $region23: #{tpu_custom_call.1} parent=11 // pred_region
          _
        $region24: #{tpu_custom_call.1} parent=11 // pred_fallthru
          _
        // Predicated region
        $region25: #{tpu_custom_call.1} parent=11 // pred_check
          %p240 = pneg %p127
        $region26: #{tpu_custom_call.1} parent=11 // pred_check_branch
          %242 = sbr.rel (%p240) target = $region28
        $region27: #{tpu_custom_call.1} parent=11 // pred_region
          _
        $region28: #{tpu_custom_call.1} parent=11 // pred_fallthru
          _
        // Predicated region
        $region29: #{tpu_custom_call.1} parent=11 // pred_check
          %p243 = pneg %p148
        $region30: #{tpu_custom_call.1} parent=11 // pred_check_branch
          %245 = sbr.rel (%p243) target = $region32
        $region31: #{tpu_custom_call.1} parent=11 // pred_region
          _
        $region32: #{tpu_custom_call.1} parent=11 // pred_fallthru
          _
        // Predicated region
        $region33: #{tpu_custom_call.1} parent=11 // pred_check
          %p246 = pneg %p169
        $region34: #{tpu_custom_call.1} parent=11 // pred_check_branch
          %248 = sbr.rel (%p246) target = $region36
        $region35: #{tpu_custom_call.1} parent=11 // pred_region
          _
        $region36: #{tpu_custom_call.1} parent=11 // pred_fallthru
          _
        // Predicated region
        $region37: #{tpu_custom_call.1} parent=11 // pred_check
          %p249 = pneg %p190
        $region38: #{tpu_custom_call.1} parent=11 // pred_check_branch
          %251 = sbr.rel (%p249) target = $region40
        $region39: #{tpu_custom_call.1} parent=11 // pred_region
          _
        $region40: #{tpu_custom_call.1} parent=11 // pred_fallthru
          _
      $region12: #{tpu_custom_call.1} parent=5 // pred_fallthru
        _
      %p252 = scmp.lt.s32.totalorder %s17, 2
      // Predicated region
      $region41: #{tpu_custom_call.1} parent=5 // pred_check
        %p253 = pneg %p252
      $region42: #{tpu_custom_call.1} parent=5 // pred_check_branch
        %255 = sbr.rel (%p253) target = $region44
      $region43: #{tpu_custom_call.1} parent=5 // pred_region
        // Predicated region
        $region45: #{tpu_custom_call.1} parent=43 // pred_check
          %p256 = pneg %p37
        $region46: #{tpu_custom_call.1} parent=43 // pred_check_branch
          %258 = sbr.rel (%p256) target = $region48
        $region47: #{tpu_custom_call.1} parent=43 // pred_region
          %p259 = scmp.lt.s32.totalorder %s17, 1
          %s260 = scalar_select %p259, %s17, 1
          %s261 = smul.addr %s260, 8
          %s262 = scalar_lea.vmem %s0, %s261
        $region48: #{tpu_custom_call.1} parent=43 // pred_fallthru
          _
      $region44: #{tpu_custom_call.1} parent=5 // pred_fallthru
        _
      %p263 = scmp.le.s32.totalorder 1, %s17
      %p264 = scmp.lt.s32.totalorder %s17, 3
      %p265 = pnand %p263, %p264
      %p266 = pneg %p265
      // Predicated region
      $region49: #{tpu_custom_call.1} parent=5 // pred_check
        _
      $region50: #{tpu_custom_call.1} parent=5 // pred_check_branch
        %268 = sbr.rel (%p265) target = $region52
      $region51: #{tpu_custom_call.1} parent=5 // pred_region
        %s269 = ssub.s32 %s17, 1
        %p270 = scmp.lt.s32.totalorder %s22, 1
        %s271 = scalar_select %p270, %s22, 1
        %s272 = smul.addr %s271, 8
        %s273 = scalar_lea.vmem %s0, %s272
        %p274 = pneg %p43
        %p275 = pneg %p40
        %p276 = pneg %p64
        %p277 = pneg %p61
        %p278 = pneg %p85
        %p279 = pneg %p82
        %p280 = pneg %p106
        %p281 = pneg %p103
        %p282 = pneg %p127
        %p283 = pneg %p124
        %p284 = pneg %p148
        %p285 = pneg %p145
        %p286 = pneg %p169
        %p287 = pneg %p166
        %p288 = pneg %p190
        %p289 = pneg %p187
        %p290 = pneg %p216
        %p291 = pneg %p213
        %s292 = sand.u32 %s203, 1
        %s293 = scalar_lea.sflag [#allocation3], %s292
        %s294 = sand.u32 %s203, 1
        %s295 = smul.addr %s294, 8
        %s296 = scalar_lea.vmem [#allocation2], %s295
        %p297 = scmp.lt.s32.totalorder %s22, 1
        %s298 = scalar_select %p297, %s22, 1
        %s299 = smul.addr %s298, 8
        %s300 = scalar_lea.vmem %s0, %s299
        %v302 = vld [vmem:[%s300] sm:$0xff]
        %v303 = vld [vmem:[%s1] sm:$0xff]
        %v304 = vld [vmem:[%s2] sm:$0x1]
        %v305 = vld [vmem:[%s2 + $0x1] sm:$0x1]
        %v306 = vld [vmem:[%s2 + $0x2] sm:$0x1]
        %v307 = vld [vmem:[%s2 + $0x3] sm:$0x1]
        %v308 = vld [vmem:[%s2 + $0x4] sm:$0x1]
        %v309 = vld [vmem:[%s2 + $0x5] sm:$0x1]
        %v310 = vld [vmem:[%s2 + $0x6] sm:$0x1]
        %vm311 = vcmask 261120
        %v312 = vsel %vm311, %v302, 0.0
        %313 = vadd.xlane.f32.xlu0 %v312
        %v314 = vpop.xlane.xlu0 %313
        %v315 = vrcp.pop 32.0
        %v316 = vmul.f32 %v314, %v315
        %v317 = vsub.f32 %v302, %v316
        %v318 = vmul.f32 %v317, %v317
        %v319 = vsel %vm311, %v318, 0.0
        %320 = vadd.xlane.f32.xlu0 %v319
        %v321 = vpop.xlane.xlu0 %320
        %v322 = vmul.f32 %v321, %v315
        %v323 = vadd.f32 %v322, 1e-05
        %v324 = vrsqrt.pop %v323
        %v325 = vmul.f32 %v317, %v324
        %v326 = vlaneseq
        %v327 = vshrl.u32 %v326, 7
        %v328 = vsub.s32 0, %v327
        %v329 = vrot.slane %v304, %v328
        %v330 = vmul.f32 %v325, %v329
        %v331 = vlaneseq
        %v332 = vshrl.u32 %v331, 7
        %v333 = vsub.s32 0, %v332
        %v334 = vrot.slane %v305, %v333
        %v335 = vadd.f32 %v330, %v334
        %v336 = vpack.c.bf16 %v335, %v335
        %v337 = vld [vmem:[%s4] sm:$0xf]
        %v338 = vld [vmem:[%s4 + $0x4] sm:$0xf]
        %v339 = vld [vmem:[%s4 + $0x8] sm:$0xf]
        %v340 = vld [vmem:[%s4 + $0xc] sm:$0xf]
        %v341 = vld [vmem:[%s4 + $0x10] sm:$0xf]
        %v342 = vld [vmem:[%s4 + $0x14] sm:$0xf]
        %v343 = vld [vmem:[%s4 + $0x18] sm:$0xf]
        %v344 = vld [vmem:[%s4 + $0x1c] sm:$0xf]
        %v345 = vld [vmem:[%s4 + $0x20] sm:$0xf]
        %v346 = vld [vmem:[%s4 + $0x24] sm:$0xf]
        %v347 = vld [vmem:[%s4 + $0x28] sm:$0xf]
        %v348 = vld [vmem:[%s4 + $0x2c] sm:$0xf]
        %v349 = vld [vmem:[%s4 + $0x30] sm:$0xf]
        %v350 = vld [vmem:[%s4 + $0x34] sm:$0xf]
        %v351 = vld [vmem:[%s4 + $0x38] sm:$0xf]
        %v352 = vld [vmem:[%s4 + $0x3c] sm:$0xf]
        %v353 = vld [vmem:[%s3] sm:$0x1]
        %v354 = vld [vmem:[%s3 + $0x1] sm:$0x1]
        %v355 = vld [vmem:[%s3 + $0x2] sm:$0x1]
        %v356 = vld [vmem:[%s3 + $0x3] sm:$0x1]
        %v361 = vlaneseq
        %v362 = vshrl.u32 %v361, 7
        %v363 = vsub.s32 0, %v362
        %v364 = vrot.slane %v353, %v363
        %v365 = vlaneseq
        %v366 = vshrl.u32 %v365, 7
        %v367 = vsub.s32 0, %v366
        %v368 = vrot.slane %v354, %v367
        %v369 = vlaneseq
        %v370 = vshrl.u32 %v369, 7
        %v371 = vsub.s32 0, %v370
        %v372 = vrot.slane %v355, %v371
        %v373 = vlaneseq
        %v374 = vshrl.u32 %v373, 7
        %v375 = vsub.s32 0, %v374
        %v376 = vrot.slane %v356, %v375
        %v385 = vunpack.c.l.b16 %v337
        %v386 = vunpack.c.l.b16 %v338
        %v387 = vunpack.c.l.b16 %v339
        %v388 = vunpack.c.l.b16 %v340
        %v389 = vpack.c.b16 %v386, %v385
        %v390 = vpack.c.b16 %v388, %v387
        %v394 = vsel %vm311, %v336, 0
        %396 = vmatprep.subr.bf16.mxu0 0
        %397 = vmatpush1.bf16.msra.mxu0 %v389
        %398 = vmatprep.subr.bf16.mxu0 0
        %399 = vmatpush1.bf16.msra.mxu0 %v390
        %400 = vmatprep.subr.bf16.mxu0 0
        %401 = vmatpush1.bf16.msra.mxu0 0
        %402 = vmatprep.subr.bf16.mxu0 0
        %403 = vmatpush1.bf16.msra.mxu0 0
        %404 = vmatprep.subr.bf16.mxu0 0
        %405 = vmatpush1.bf16.msra.mxu0 0
        %406 = vmatprep.subr.bf16.mxu0 0
        %407 = vmatpush1.bf16.msra.mxu0 0
        %408 = vmatprep.subr.bf16.mxu0 0
        %409 = vmatpush1.bf16.msra.mxu0 0
        %410 = vmatprep.subr.bf16.mxu0 0
        %411 = vmatpush1.bf16.msra.mxu0 0
        %412 = vmatprep.subr.bf16.mxu0 0
        %413 = vmatpush1.bf16.msra.mxu0 0
        %414 = vmatprep.subr.bf16.mxu0 0
        %415 = vmatpush1.bf16.msra.mxu0 0
        %416 = vmatprep.subr.bf16.mxu0 0
        %417 = vmatpush1.bf16.msra.mxu0 0
        %418 = vmatprep.subr.bf16.mxu0 0
        %419 = vmatpush1.bf16.msra.mxu0 0
        %420 = vmatprep.subr.bf16.mxu0 0
        %421 = vmatpush1.bf16.msra.mxu0 0
        %422 = vmatprep.subr.bf16.mxu0 0
        %423 = vmatpush1.bf16.msra.mxu0 0
        %424 = vmatprep.subr.bf16.mxu0 0
        %425 = vmatpush1.bf16.msra.mxu0 0
        %426 = vmatprep.subr.bf16.mxu0 0
        %427 = vmatpush1.bf16.msra.mxu0 0
        %428 = vmatprep.mubr.bf16.mxu0 0
        %429 = vmatmul.mubr.bf16.gmra.mrb[0].mxu0 %v394
        %v430 = vpop.f32.mrb[0].mxu0
        %v431 = vadd.f32 %v364, %v430
        %v432 = vpop.f32.mrb[0].mxu0
        %v433 = vpop.f32.mrb[0].mxu0
        %v434 = vpop.f32.mrb[0].mxu0
        %435 = vdwg.mxu0
        %v440 = vunpack.c.l.b16 %v341
        %v441 = vunpack.c.l.b16 %v342
        %v442 = vunpack.c.l.b16 %v343
        %v443 = vunpack.c.l.b16 %v344
        %v444 = vpack.c.b16 %v441, %v440
        %v445 = vpack.c.b16 %v443, %v442
        %448 = vmatprep.subr.bf16.mxu0 0
        %449 = vmatpush1.bf16.msra.mxu0 %v444
        %450 = vmatprep.subr.bf16.mxu0 0
        %451 = vmatpush1.bf16.msra.mxu0 %v445
        %452 = vmatprep.subr.bf16.mxu0 0
        %453 = vmatpush1.bf16.msra.mxu0 0
        %454 = vmatprep.subr.bf16.mxu0 0
        %455 = vmatpush1.bf16.msra.mxu0 0
        %456 = vmatprep.subr.bf16.mxu0 0
        %457 = vmatpush1.bf16.msra.mxu0 0
        %458 = vmatprep.subr.bf16.mxu0 0
        %459 = vmatpush1.bf16.msra.mxu0 0
        %460 = vmatprep.subr.bf16.mxu0 0
        %461 = vmatpush1.bf16.msra.mxu0 0
        %462 = vmatprep.subr.bf16.mxu0 0
        %463 = vmatpush1.bf16.msra.mxu0 0
        %464 = vmatprep.subr.bf16.mxu0 0
        %465 = vmatpush1.bf16.msra.mxu0 0
        %466 = vmatprep.subr.bf16.mxu0 0
        %467 = vmatpush1.bf16.msra.mxu0 0
        %468 = vmatprep.subr.bf16.mxu0 0
        %469 = vmatpush1.bf16.msra.mxu0 0
        %470 = vmatprep.subr.bf16.mxu0 0
        %471 = vmatpush1.bf16.msra.mxu0 0
        %472 = vmatprep.subr.bf16.mxu0 0
        %473 = vmatpush1.bf16.msra.mxu0 0
        %474 = vmatprep.subr.bf16.mxu0 0
        %475 = vmatpush1.bf16.msra.mxu0 0
        %476 = vmatprep.subr.bf16.mxu0 0
        %477 = vmatpush1.bf16.msra.mxu0 0
        %478 = vmatprep.subr.bf16.mxu0 0
        %479 = vmatpush1.bf16.msra.mxu0 0
        %480 = vmatprep.mubr.bf16.mxu0 0
        %481 = vmatmul.mubr.bf16.gmra.mrb[0].mxu0 %v394
        %v482 = vpop.f32.mrb[0].mxu0
        %v483 = vadd.f32 %v368, %v482
        %v484 = vpop.f32.mrb[0].mxu0
        %v485 = vpop.f32.mrb[0].mxu0
        %v486 = vpop.f32.mrb[0].mxu0
        %487 = vdwg.mxu0
        %v492 = vunpack.c.l.b16 %v345
        %v493 = vunpack.c.l.b16 %v346
        %v494 = vunpack.c.l.b16 %v347
        %v495 = vunpack.c.l.b16 %v348
        %v496 = vpack.c.b16 %v493, %v492
        %v497 = vpack.c.b16 %v495, %v494
        %500 = vmatprep.subr.bf16.mxu0 0
        %501 = vmatpush1.bf16.msra.mxu0 %v496
        %502 = vmatprep.subr.bf16.mxu0 0
        %503 = vmatpush1.bf16.msra.mxu0 %v497
        %504 = vmatprep.subr.bf16.mxu0 0
        %505 = vmatpush1.bf16.msra.mxu0 0
        %506 = vmatprep.subr.bf16.mxu0 0
        %507 = vmatpush1.bf16.msra.mxu0 0
        %508 = vmatprep.subr.bf16.mxu0 0
        %509 = vmatpush1.bf16.msra.mxu0 0
        %510 = vmatprep.subr.bf16.mxu0 0
        %511 = vmatpush1.bf16.msra.mxu0 0
        %512 = vmatprep.subr.bf16.mxu0 0
        %513 = vmatpush1.bf16.msra.mxu0 0
        %514 = vmatprep.subr.bf16.mxu0 0
        %515 = vmatpush1.bf16.msra.mxu0 0
        %516 = vmatprep.subr.bf16.mxu0 0
        %517 = vmatpush1.bf16.msra.mxu0 0
        %518 = vmatprep.subr.bf16.mxu0 0
        %519 = vmatpush1.bf16.msra.mxu0 0
        %520 = vmatprep.subr.bf16.mxu0 0
        %521 = vmatpush1.bf16.msra.mxu0 0
        %522 = vmatprep.subr.bf16.mxu0 0
        %523 = vmatpush1.bf16.msra.mxu0 0
        %524 = vmatprep.subr.bf16.mxu0 0
        %525 = vmatpush1.bf16.msra.mxu0 0
        %526 = vmatprep.subr.bf16.mxu0 0
        %527 = vmatpush1.bf16.msra.mxu0 0
        %528 = vmatprep.subr.bf16.mxu0 0
        %529 = vmatpush1.bf16.msra.mxu0 0
        %530 = vmatprep.subr.bf16.mxu0 0
        %531 = vmatpush1.bf16.msra.mxu0 0
        %532 = vmatprep.mubr.bf16.mxu0 0
        %533 = vmatmul.mubr.bf16.gmra.mrb[0].mxu0 %v394
        %v534 = vpop.f32.mrb[0].mxu0
        %v535 = vadd.f32 %v372, %v534
        %v536 = vpop.f32.mrb[0].mxu0
        %v537 = vpop.f32.mrb[0].mxu0
        %v538 = vpop.f32.mrb[0].mxu0
        %539 = vdwg.mxu0
        %v544 = vunpack.c.l.b16 %v349
        %v545 = vunpack.c.l.b16 %v350
        %v546 = vunpack.c.l.b16 %v351
        %v547 = vunpack.c.l.b16 %v352
        %v548 = vpack.c.b16 %v545, %v544
        %v549 = vpack.c.b16 %v547, %v546
        %552 = vmatprep.subr.bf16.mxu0 0
        %553 = vmatpush1.bf16.msra.mxu0 %v548
        %554 = vmatprep.subr.bf16.mxu0 0
        %555 = vmatpush1.bf16.msra.mxu0 %v549
        %556 = vmatprep.subr.bf16.mxu0 0
        %557 = vmatpush1.bf16.msra.mxu0 0
        %558 = vmatprep.subr.bf16.mxu0 0
        %559 = vmatpush1.bf16.msra.mxu0 0
        %560 = vmatprep.subr.bf16.mxu0 0
        %561 = vmatpush1.bf16.msra.mxu0 0
        %562 = vmatprep.subr.bf16.mxu0 0
        %563 = vmatpush1.bf16.msra.mxu0 0
        %564 = vmatprep.subr.bf16.mxu0 0
        %565 = vmatpush1.bf16.msra.mxu0 0
        %566 = vmatprep.subr.bf16.mxu0 0
        %567 = vmatpush1.bf16.msra.mxu0 0
        %568 = vmatprep.subr.bf16.mxu0 0
        %569 = vmatpush1.bf16.msra.mxu0 0
        %570 = vmatprep.subr.bf16.mxu0 0
        %571 = vmatpush1.bf16.msra.mxu0 0
        %572 = vmatprep.subr.bf16.mxu0 0
        %573 = vmatpush1.bf16.msra.mxu0 0
        %574 = vmatprep.subr.bf16.mxu0 0
        %575 = vmatpush1.bf16.msra.mxu0 0
        %576 = vmatprep.subr.bf16.mxu0 0
        %577 = vmatpush1.bf16.msra.mxu0 0
        %578 = vmatprep.subr.bf16.mxu0 0
        %579 = vmatpush1.bf16.msra.mxu0 0
        %580 = vmatprep.subr.bf16.mxu0 0
        %581 = vmatpush1.bf16.msra.mxu0 0
        %582 = vmatprep.subr.bf16.mxu0 0
        %583 = vmatpush1.bf16.msra.mxu0 0
        %584 = vmatprep.mubr.bf16.mxu0 0
        %585 = vmatmul.mubr.bf16.gmra.mrb[0].mxu0 %v394
        %v586 = vpop.f32.mrb[0].mxu0
        %v587 = vadd.f32 %v376, %v586
        %v588 = vpop.f32.mrb[0].mxu0
        %v589 = vpop.f32.mrb[0].mxu0
        %v590 = vpop.f32.mrb[0].mxu0
        %591 = vdwg.mxu0
        %v592 = vpack.c.bf16 %v431, %v431
        %v593 = vpack.c.bf16 %v483, %v483
        %v594 = vpack.c.bf16 %v535, %v535
        %v595 = vpack.c.bf16 %v587, %v587
        %597 = vrot.lane.b32.xlu0 %v592, 120
        %v598 = vpop.permute.xlu0 %597
        %vm599 = vcmask 64512
        %v601 = vsel %vm599, %v592, 0
        %v604 = vsel %vm599, %v598, 0
        %606 = vmatprep.subr.bf16.mxu0 0
        %607 = vmatpush1.bf16.xpose.msra.mxu0 %v604
        %608 = vmatprep.subr.bf16.mxu0 0
        %609 = vmatpush1.bf16.xpose.msra.mxu0 0
        %610 = vmatprep.subr.bf16.mxu0 0
        %611 = vmatpush1.bf16.xpose.msra.mxu0 0
        %612 = vmatprep.subr.bf16.mxu0 0
        %613 = vmatpush1.bf16.xpose.msra.mxu0 0
        %614 = vmatprep.subr.bf16.mxu0 0
        %615 = vmatpush1.bf16.xpose.msra.mxu0 0
        %616 = vmatprep.subr.bf16.mxu0 0
        %617 = vmatpush1.bf16.xpose.msra.mxu0 0
        %618 = vmatprep.subr.bf16.mxu0 0
        %619 = vmatpush1.bf16.xpose.msra.mxu0 0
        %620 = vmatprep.subr.bf16.mxu0 0
        %621 = vmatpush1.bf16.xpose.msra.mxu0 0
        %622 = vmatprep.subr.bf16.mxu0 0
        %623 = vmatpush1.bf16.xpose.msra.mxu0 0
        %624 = vmatprep.subr.bf16.mxu0 0
        %625 = vmatpush1.bf16.xpose.msra.mxu0 0
        %626 = vmatprep.subr.bf16.mxu0 0
        %627 = vmatpush1.bf16.xpose.msra.mxu0 0
        %628 = vmatprep.subr.bf16.mxu0 0
        %629 = vmatpush1.bf16.xpose.msra.mxu0 0
        %630 = vmatprep.subr.bf16.mxu0 0
        %631 = vmatpush1.bf16.xpose.msra.mxu0 0
        %632 = vmatprep.subr.bf16.mxu0 0
        %633 = vmatpush1.bf16.xpose.msra.mxu0 0
        %634 = vmatprep.subr.bf16.mxu0 0
        %635 = vmatpush1.bf16.xpose.msra.mxu0 0
        %636 = vmatprep.subr.bf16.mxu0 0
        %637 = vmatpush1.bf16.xpose.msra.mxu0 0
        %638 = vmatprep.mubr.bf16.mxu0 0
        %639 = vmatmul.mubr.bf16.gmra.mrb[0].mxu0 %v601
        %v640 = vpop.f32.mrb[0].mxu0
        %v641 = vadd.f32 %v303, %v640
        %v642 = vpop.f32.mrb[0].mxu0
        %v643 = vpop.f32.mrb[0].mxu0
        %v644 = vpop.f32.mrb[0].mxu0
        %645 = vdwg.mxu0
        %647 = vrot.lane.b32.xlu0 %v593, 120
        %v648 = vpop.permute.xlu0 %647
        %v650 = vsel %vm599, %v593, 0
        %v653 = vsel %vm599, %v648, 0
        %655 = vmatprep.subr.bf16.mxu0 0
        %656 = vmatpush1.bf16.xpose.msra.mxu0 %v653
        %657 = vmatprep.subr.bf16.mxu0 0
        %658 = vmatpush1.bf16.xpose.msra.mxu0 0
        %659 = vmatprep.subr.bf16.mxu0 0
        %660 = vmatpush1.bf16.xpose.msra.mxu0 0
        %661 = vmatprep.subr.bf16.mxu0 0
        %662 = vmatpush1.bf16.xpose.msra.mxu0 0
        %663 = vmatprep.subr.bf16.mxu0 0
        %664 = vmatpush1.bf16.xpose.msra.mxu0 0
        %665 = vmatprep.subr.bf16.mxu0 0
        %666 = vmatpush1.bf16.xpose.msra.mxu0 0
        %667 = vmatprep.subr.bf16.mxu0 0
        %668 = vmatpush1.bf16.xpose.msra.mxu0 0
        %669 = vmatprep.subr.bf16.mxu0 0
        %670 = vmatpush1.bf16.xpose.msra.mxu0 0
        %671 = vmatprep.subr.bf16.mxu0 0
        %672 = vmatpush1.bf16.xpose.msra.mxu0 0
        %673 = vmatprep.subr.bf16.mxu0 0
        %674 = vmatpush1.bf16.xpose.msra.mxu0 0
        %675 = vmatprep.subr.bf16.mxu0 0
        %676 = vmatpush1.bf16.xpose.msra.mxu0 0
        %677 = vmatprep.subr.bf16.mxu0 0
        %678 = vmatpush1.bf16.xpose.msra.mxu0 0
        %679 = vmatprep.subr.bf16.mxu0 0
        %680 = vmatpush1.bf16.xpose.msra.mxu0 0
        %681 = vmatprep.subr.bf16.mxu0 0
        %682 = vmatpush1.bf16.xpose.msra.mxu0 0
        %683 = vmatprep.subr.bf16.mxu0 0
        %684 = vmatpush1.bf16.xpose.msra.mxu0 0
        %685 = vmatprep.subr.bf16.mxu0 0
        %686 = vmatpush1.bf16.xpose.msra.mxu0 0
        %687 = vmatprep.mubr.bf16.mxu0 0
        %688 = vmatmul.mubr.bf16.gmra.mrb[0].mxu0 %v650
        %v689 = vpop.f32.mrb[0].mxu0
        %v690 = vadd.f32 %v303, %v689
        %v691 = vpop.f32.mrb[0].mxu0
        %v692 = vpop.f32.mrb[0].mxu0
        %v693 = vpop.f32.mrb[0].mxu0
        %694 = vdwg.mxu0
        %696 = vrot.lane.b32.xlu0 %v594, 120
        %v697 = vpop.permute.xlu0 %696
        %v699 = vsel %vm599, %v594, 0
        %v702 = vsel %vm599, %v697, 0
        %704 = vmatprep.subr.bf16.mxu0 0
        %705 = vmatpush1.bf16.xpose.msra.mxu0 %v702
        %706 = vmatprep.subr.bf16.mxu0 0
        %707 = vmatpush1.bf16.xpose.msra.mxu0 0
        %708 = vmatprep.subr.bf16.mxu0 0
        %709 = vmatpush1.bf16.xpose.msra.mxu0 0
        %710 = vmatprep.subr.bf16.mxu0 0
        %711 = vmatpush1.bf16.xpose.msra.mxu0 0
        %712 = vmatprep.subr.bf16.mxu0 0
        %713 = vmatpush1.bf16.xpose.msra.mxu0 0
        %714 = vmatprep.subr.bf16.mxu0 0
        %715 = vmatpush1.bf16.xpose.msra.mxu0 0
        %716 = vmatprep.subr.bf16.mxu0 0
        %717 = vmatpush1.bf16.xpose.msra.mxu0 0
        %718 = vmatprep.subr.bf16.mxu0 0
        %719 = vmatpush1.bf16.xpose.msra.mxu0 0
        %720 = vmatprep.subr.bf16.mxu0 0
        %721 = vmatpush1.bf16.xpose.msra.mxu0 0
        %722 = vmatprep.subr.bf16.mxu0 0
        %723 = vmatpush1.bf16.xpose.msra.mxu0 0
        %724 = vmatprep.subr.bf16.mxu0 0
        %725 = vmatpush1.bf16.xpose.msra.mxu0 0
        %726 = vmatprep.subr.bf16.mxu0 0
        %727 = vmatpush1.bf16.xpose.msra.mxu0 0
        %728 = vmatprep.subr.bf16.mxu0 0
        %729 = vmatpush1.bf16.xpose.msra.mxu0 0
        %730 = vmatprep.subr.bf16.mxu0 0
        %731 = vmatpush1.bf16.xpose.msra.mxu0 0
        %732 = vmatprep.subr.bf16.mxu0 0
        %733 = vmatpush1.bf16.xpose.msra.mxu0 0
        %734 = vmatprep.subr.bf16.mxu0 0
        %735 = vmatpush1.bf16.xpose.msra.mxu0 0
        %736 = vmatprep.mubr.bf16.mxu0 0
        %737 = vmatmul.mubr.bf16.gmra.mrb[0].mxu0 %v699
        %v738 = vpop.f32.mrb[0].mxu0
        %v739 = vadd.f32 %v303, %v738
        %v740 = vpop.f32.mrb[0].mxu0
        %v741 = vpop.f32.mrb[0].mxu0
        %v742 = vpop.f32.mrb[0].mxu0
        %743 = vdwg.mxu0
        %745 = vrot.lane.b32.xlu0 %v595, 120
        %v746 = vpop.permute.xlu0 %745
        %v748 = vsel %vm599, %v595, 0
        %v751 = vsel %vm599, %v746, 0
        %753 = vmatprep.subr.bf16.mxu0 0
        %754 = vmatpush1.bf16.xpose.msra.mxu0 %v751
        %755 = vmatprep.subr.bf16.mxu0 0
        %756 = vmatpush1.bf16.xpose.msra.mxu0 0
        %757 = vmatprep.subr.bf16.mxu0 0
        %758 = vmatpush1.bf16.xpose.msra.mxu0 0
        %759 = vmatprep.subr.bf16.mxu0 0
        %760 = vmatpush1.bf16.xpose.msra.mxu0 0
        %761 = vmatprep.subr.bf16.mxu0 0
        %762 = vmatpush1.bf16.xpose.msra.mxu0 0
        %763 = vmatprep.subr.bf16.mxu0 0
        %764 = vmatpush1.bf16.xpose.msra.mxu0 0
        %765 = vmatprep.subr.bf16.mxu0 0
        %766 = vmatpush1.bf16.xpose.msra.mxu0 0
        %767 = vmatprep.subr.bf16.mxu0 0
        %768 = vmatpush1.bf16.xpose.msra.mxu0 0
        %769 = vmatprep.subr.bf16.mxu0 0
        %770 = vmatpush1.bf16.xpose.msra.mxu0 0
        %771 = vmatprep.subr.bf16.mxu0 0
        %772 = vmatpush1.bf16.xpose.msra.mxu0 0
        %773 = vmatprep.subr.bf16.mxu0 0
        %774 = vmatpush1.bf16.xpose.msra.mxu0 0
        %775 = vmatprep.subr.bf16.mxu0 0
        %776 = vmatpush1.bf16.xpose.msra.mxu0 0
        %777 = vmatprep.subr.bf16.mxu0 0
        %778 = vmatpush1.bf16.xpose.msra.mxu0 0
        %779 = vmatprep.subr.bf16.mxu0 0
        %780 = vmatpush1.bf16.xpose.msra.mxu0 0
        %781 = vmatprep.subr.bf16.mxu0 0
        %782 = vmatpush1.bf16.xpose.msra.mxu0 0
        %783 = vmatprep.subr.bf16.mxu0 0
        %784 = vmatpush1.bf16.xpose.msra.mxu0 0
        %785 = vmatprep.mubr.bf16.mxu0 0
        %786 = vmatmul.mubr.bf16.gmra.mrb[0].mxu0 %v748
        %v787 = vpop.f32.mrb[0].mxu0
        %v788 = vadd.f32 %v303, %v787
        %v789 = vpop.f32.mrb[0].mxu0
        %v790 = vpop.f32.mrb[0].mxu0
        %v791 = vpop.f32.mrb[0].mxu0
        %792 = vdwg.mxu0
        %v793 = vsel %vm599, %v641, -inf
        %794 = vmax.xlane.f32.xlu0 %v793
        %v795 = vpop.xlane.xlu0 %794
        %v796 = vsel %vm599, %v690, -inf
        %797 = vmax.xlane.f32.xlu0 %v796
        %v798 = vpop.xlane.xlu0 %797
        %v799 = vsel %vm599, %v739, -inf
        %800 = vmax.xlane.f32.xlu0 %v799
        %v801 = vpop.xlane.xlu0 %800
        %v802 = vsel %vm599, %v788, -inf
        %803 = vmax.xlane.f32.xlu0 %v802
        %v804 = vpop.xlane.xlu0 %803
        %v805 = vsub.f32 %v641, %v795
        %v806 = vsub.f32 %v690, %v798
        %v807 = vsub.f32 %v739, %v801
        %v808 = vsub.f32 %v788, %v804
        %v809 = vmul.f32 %v805, 1.442695
        %v810 = vpow.pop %v809
        %v811 = vmul.f32 %v806, 1.442695
        %v812 = vpow.pop %v811
        %v813 = vmul.f32 %v807, 1.442695
        %v814 = vpow.pop %v813
        %v815 = vmul.f32 %v808, 1.442695
        %v816 = vpow.pop %v815
        %v817 = vsel %vm599, %v810, 0.0
        %818 = vadd.xlane.f32.xlu0 %v817
        %v819 = vpop.xlane.xlu0 %818
        %v820 = vsel %vm599, %v812, 0.0
        %821 = vadd.xlane.f32.xlu0 %v820
        %v822 = vpop.xlane.xlu0 %821
        %v823 = vsel %vm599, %v814, 0.0
        %824 = vadd.xlane.f32.xlu0 %v823
        %v825 = vpop.xlane.xlu0 %824
        %v826 = vsel %vm599, %v816, 0.0
        %827 = vadd.xlane.f32.xlu0 %v826
        %v828 = vpop.xlane.xlu0 %827
        %v829 = vrcp.pop %v819
        %v830 = vrcp.pop %v822
        %v831 = vrcp.pop %v825
        %v832 = vrcp.pop %v828
        %v833 = vmul.f32 %v810, %v829
        %v834 = vmul.f32 %v812, %v830
        %v835 = vmul.f32 %v814, %v831
        %v836 = vmul.f32 %v816, %v832
        %v837 = vpack.c.bf16 %v833, %v833
        %v838 = vpack.c.bf16 %v834, %v834
        %v839 = vpack.c.bf16 %v835, %v835
        %v840 = vpack.c.bf16 %v836, %v836
        %841 = vrot.lane.b32.xlu0 %v592, 112
        %v842 = vpop.permute.xlu0 %841
        %v844 = vsel %vm599, %v837, 0
        %vm846 = vcmask 1043456
        %v848 = vsel %vm846, %v842, 0
        %850 = vmatprep.subr.bf16.mxu0 0
        %851 = vmatpush1.bf16.msra.mxu0 %v848
        %852 = vmatprep.subr.bf16.mxu0 0
        %853 = vmatpush1.bf16.msra.mxu0 0
        %854 = vmatprep.subr.bf16.mxu0 0
        %855 = vmatpush1.bf16.msra.mxu0 0
        %856 = vmatprep.subr.bf16.mxu0 0
        %857 = vmatpush1.bf16.msra.mxu0 0
        %858 = vmatprep.subr.bf16.mxu0 0
        %859 = vmatpush1.bf16.msra.mxu0 0
        %860 = vmatprep.subr.bf16.mxu0 0
        %861 = vmatpush1.bf16.msra.mxu0 0
        %862 = vmatprep.subr.bf16.mxu0 0
        %863 = vmatpush1.bf16.msra.mxu0 0
        %864 = vmatprep.subr.bf16.mxu0 0
        %865 = vmatpush1.bf16.msra.mxu0 0
        %866 = vmatprep.subr.bf16.mxu0 0
        %867 = vmatpush1.bf16.msra.mxu0 0
        %868 = vmatprep.subr.bf16.mxu0 0
        %869 = vmatpush1.bf16.msra.mxu0 0
        %870 = vmatprep.subr.bf16.mxu0 0
        %871 = vmatpush1.bf16.msra.mxu0 0
        %872 = vmatprep.subr.bf16.mxu0 0
        %873 = vmatpush1.bf16.msra.mxu0 0
        %874 = vmatprep.subr.bf16.mxu0 0
        %875 = vmatpush1.bf16.msra.mxu0 0
        %876 = vmatprep.subr.bf16.mxu0 0
        %877 = vmatpush1.bf16.msra.mxu0 0
        %878 = vmatprep.subr.bf16.mxu0 0
        %879 = vmatpush1.bf16.msra.mxu0 0
        %880 = vmatprep.subr.bf16.mxu0 0
        %881 = vmatpush1.bf16.msra.mxu0 0
        %882 = vmatprep.mubr.bf16.mxu0 0
        %883 = vmatmul.mubr.bf16.gmra.mrb[0].mxu0 %v844
        %v884 = vpop.f32.mrb[0].mxu0
        %v885 = vadd.f32 0.0, %v884
        %v886 = vpop.f32.mrb[0].mxu0
        %v887 = vpop.f32.mrb[0].mxu0
        %v888 = vpop.f32.mrb[0].mxu0
        %889 = vdwg.mxu0
        %890 = vrot.lane.b32.xlu0 %v593, 112
        %v891 = vpop.permute.xlu0 %890
        %v893 = vsel %vm599, %v838, 0
        %v896 = vsel %vm846, %v891, 0
        %898 = vmatprep.subr.bf16.mxu0 0
        %899 = vmatpush1.bf16.msra.mxu0 %v896
        %900 = vmatprep.subr.bf16.mxu0 0
        %901 = vmatpush1.bf16.msra.mxu0 0
        %902 = vmatprep.subr.bf16.mxu0 0
        %903 = vmatpush1.bf16.msra.mxu0 0
        %904 = vmatprep.subr.bf16.mxu0 0
        %905 = vmatpush1.bf16.msra.mxu0 0
        %906 = vmatprep.subr.bf16.mxu0 0
        %907 = vmatpush1.bf16.msra.mxu0 0
        %908 = vmatprep.subr.bf16.mxu0 0
        %909 = vmatpush1.bf16.msra.mxu0 0
        %910 = vmatprep.subr.bf16.mxu0 0
        %911 = vmatpush1.bf16.msra.mxu0 0
        %912 = vmatprep.subr.bf16.mxu0 0
        %913 = vmatpush1.bf16.msra.mxu0 0
        %914 = vmatprep.subr.bf16.mxu0 0
        %915 = vmatpush1.bf16.msra.mxu0 0
        %916 = vmatprep.subr.bf16.mxu0 0
        %917 = vmatpush1.bf16.msra.mxu0 0
        %918 = vmatprep.subr.bf16.mxu0 0
        %919 = vmatpush1.bf16.msra.mxu0 0
        %920 = vmatprep.subr.bf16.mxu0 0
        %921 = vmatpush1.bf16.msra.mxu0 0
        %922 = vmatprep.subr.bf16.mxu0 0
        %923 = vmatpush1.bf16.msra.mxu0 0
        %924 = vmatprep.subr.bf16.mxu0 0
        %925 = vmatpush1.bf16.msra.mxu0 0
        %926 = vmatprep.subr.bf16.mxu0 0
        %927 = vmatpush1.bf16.msra.mxu0 0
        %928 = vmatprep.subr.bf16.mxu0 0
        %929 = vmatpush1.bf16.msra.mxu0 0
        %930 = vmatprep.mubr.bf16.mxu0 0
        %931 = vmatmul.mubr.bf16.gmra.mrb[0].mxu0 %v893
        %v932 = vpop.f32.mrb[0].mxu0
        %v933 = vadd.f32 0.0, %v932
        %v934 = vpop.f32.mrb[0].mxu0
        %v935 = vpop.f32.mrb[0].mxu0
        %v936 = vpop.f32.mrb[0].mxu0
        %937 = vdwg.mxu0
        %938 = vrot.lane.b32.xlu0 %v594, 112
        %v939 = vpop.permute.xlu0 %938
        %v941 = vsel %vm599, %v839, 0
        %v944 = vsel %vm846, %v939, 0
        %946 = vmatprep.subr.bf16.mxu0 0
        %947 = vmatpush1.bf16.msra.mxu0 %v944
        %948 = vmatprep.subr.bf16.mxu0 0
        %949 = vmatpush1.bf16.msra.mxu0 0
        %950 = vmatprep.subr.bf16.mxu0 0
        %951 = vmatpush1.bf16.msra.mxu0 0
        %952 = vmatprep.subr.bf16.mxu0 0
        %953 = vmatpush1.bf16.msra.mxu0 0
        %954 = vmatprep.subr.bf16.mxu0 0
        %955 = vmatpush1.bf16.msra.mxu0 0
        %956 = vmatprep.subr.bf16.mxu0 0
        %957 = vmatpush1.bf16.msra.mxu0 0
        %958 = vmatprep.subr.bf16.mxu0 0
        %959 = vmatpush1.bf16.msra.mxu0 0
        %960 = vmatprep.subr.bf16.mxu0 0
        %961 = vmatpush1.bf16.msra.mxu0 0
        %962 = vmatprep.subr.bf16.mxu0 0
        %963 = vmatpush1.bf16.msra.mxu0 0
        %964 = vmatprep.subr.bf16.mxu0 0
        %965 = vmatpush1.bf16.msra.mxu0 0
        %966 = vmatprep.subr.bf16.mxu0 0
        %967 = vmatpush1.bf16.msra.mxu0 0
        %968 = vmatprep.subr.bf16.mxu0 0
        %969 = vmatpush1.bf16.msra.mxu0 0
        %970 = vmatprep.subr.bf16.mxu0 0
        %971 = vmatpush1.bf16.msra.mxu0 0
        %972 = vmatprep.subr.bf16.mxu0 0
        %973 = vmatpush1.bf16.msra.mxu0 0
        %974 = vmatprep.subr.bf16.mxu0 0
        %975 = vmatpush1.bf16.msra.mxu0 0
        %976 = vmatprep.subr.bf16.mxu0 0
        %977 = vmatpush1.bf16.msra.mxu0 0
        %978 = vmatprep.mubr.bf16.mxu0 0
        %979 = vmatmul.mubr.bf16.gmra.mrb[0].mxu0 %v941
        %v980 = vpop.f32.mrb[0].mxu0
        %v981 = vadd.f32 0.0, %v980
        %v982 = vpop.f32.mrb[0].mxu0
        %v983 = vpop.f32.mrb[0].mxu0
        %v984 = vpop.f32.mrb[0].mxu0
        %985 = vdwg.mxu0
        %986 = vrot.lane.b32.xlu0 %v595, 112
        %v987 = vpop.permute.xlu0 %986
        %v989 = vsel %vm599, %v840, 0
        %v992 = vsel %vm846, %v987, 0
        %994 = vmatprep.subr.bf16.mxu0 0
        %995 = vmatpush1.bf16.msra.mxu0 %v992
        %996 = vmatprep.subr.bf16.mxu0 0
        %997 = vmatpush1.bf16.msra.mxu0 0
        %998 = vmatprep.subr.bf16.mxu0 0
        %999 = vmatpush1.bf16.msra.mxu0 0
        %1000 = vmatprep.subr.bf16.mxu0 0
        %1001 = vmatpush1.bf16.msra.mxu0 0
        %1002 = vmatprep.subr.bf16.mxu0 0
        %1003 = vmatpush1.bf16.msra.mxu0 0
        %1004 = vmatprep.subr.bf16.mxu0 0
        %1005 = vmatpush1.bf16.msra.mxu0 0
        %1006 = vmatprep.subr.bf16.mxu0 0
        %1007 = vmatpush1.bf16.msra.mxu0 0
        %1008 = vmatprep.subr.bf16.mxu0 0
        %1009 = vmatpush1.bf16.msra.mxu0 0
        %1010 = vmatprep.subr.bf16.mxu0 0
        %1011 = vmatpush1.bf16.msra.mxu0 0
        %1012 = vmatprep.subr.bf16.mxu0 0
        %1013 = vmatpush1.bf16.msra.mxu0 0
        %1014 = vmatprep.subr.bf16.mxu0 0
        %1015 = vmatpush1.bf16.msra.mxu0 0
        %1016 = vmatprep.subr.bf16.mxu0 0
        %1017 = vmatpush1.bf16.msra.mxu0 0
        %1018 = vmatprep.subr.bf16.mxu0 0
        %1019 = vmatpush1.bf16.msra.mxu0 0
        %1020 = vmatprep.subr.bf16.mxu0 0
        %1021 = vmatpush1.bf16.msra.mxu0 0
        %1022 = vmatprep.subr.bf16.mxu0 0
        %1023 = vmatpush1.bf16.msra.mxu0 0
        %1024 = vmatprep.subr.bf16.mxu0 0
        %1025 = vmatpush1.bf16.msra.mxu0 0
        %1026 = vmatprep.mubr.bf16.mxu0 0
        %1027 = vmatmul.mubr.bf16.gmra.mrb[0].mxu0 %v989
        %v1028 = vpop.f32.mrb[0].mxu0
        %v1029 = vadd.f32 0.0, %v1028
        %v1030 = vpop.f32.mrb[0].mxu0
        %v1031 = vpop.f32.mrb[0].mxu0
        %v1032 = vpop.f32.mrb[0].mxu0
        %1033 = vdwg.mxu0
        %v1034 = vpack.c.bf16 %v885, %v885
        %v1035 = vpack.c.bf16 %v933, %v933
        %v1036 = vpack.c.bf16 %v981, %v981
        %v1037 = vpack.c.bf16 %v1029, %v1029
        %v1038 = vld [vmem:[%s5] sm:$0xf]
        %v1039 = vld [vmem:[%s5 + $0x4] sm:$0xf]
        %v1040 = vld [vmem:[%s5 + $0x8] sm:$0xf]
        %v1041 = vld [vmem:[%s5 + $0xc] sm:$0xf]
        %v1043 = vsel %vm599, %v1034, 0
        %v1046 = vsel %vm846, %v1038, 0
        %1048 = vmatprep.subr.bf16.mxu0 0
        %1049 = vmatpush1.bf16.msra.mxu0 %v1046
        %1050 = vmatprep.subr.bf16.mxu0 0
        %1051 = vmatpush1.bf16.msra.mxu0 0
        %1052 = vmatprep.subr.bf16.mxu0 0
        %1053 = vmatpush1.bf16.msra.mxu0 0
        %1054 = vmatprep.subr.bf16.mxu0 0
        %1055 = vmatpush1.bf16.msra.mxu0 0
        %1056 = vmatprep.subr.bf16.mxu0 0
        %1057 = vmatpush1.bf16.msra.mxu0 0
        %1058 = vmatprep.subr.bf16.mxu0 0
        %1059 = vmatpush1.bf16.msra.mxu0 0
        %1060 = vmatprep.subr.bf16.mxu0 0
        %1061 = vmatpush1.bf16.msra.mxu0 0
        %1062 = vmatprep.subr.bf16.mxu0 0
        %1063 = vmatpush1.bf16.msra.mxu0 0
        %1064 = vmatprep.subr.bf16.mxu0 0
        %1065 = vmatpush1.bf16.msra.mxu0 0
        %1066 = vmatprep.subr.bf16.mxu0 0
        %1067 = vmatpush1.bf16.msra.mxu0 0
        %1068 = vmatprep.subr.bf16.mxu0 0
        %1069 = vmatpush1.bf16.msra.mxu0 0
        %1070 = vmatprep.subr.bf16.mxu0 0
        %1071 = vmatpush1.bf16.msra.mxu0 0
        %1072 = vmatprep.subr.bf16.mxu0 0
        %1073 = vmatpush1.bf16.msra.mxu0 0
        %1074 = vmatprep.subr.bf16.mxu0 0
        %1075 = vmatpush1.bf16.msra.mxu0 0
        %1076 = vmatprep.subr.bf16.mxu0 0
        %1077 = vmatpush1.bf16.msra.mxu0 0
        %1078 = vmatprep.subr.bf16.mxu0 0
        %1079 = vmatpush1.bf16.msra.mxu0 0
        %1080 = vmatprep.mubr.bf16.mxu0 0
        %1081 = vmatmul.mubr.bf16.gmra.mrb[0].mxu0 %v1043
        %v1082 = vpop.f32.mrb[0].mxu0
        %v1083 = vadd.f32 0.0, %v1082
        %v1084 = vpop.f32.mrb[0].mxu0
        %v1085 = vpop.f32.mrb[0].mxu0
        %v1086 = vpop.f32.mrb[0].mxu0
        %1087 = vdwg.mxu0
        %v1089 = vsel %vm599, %v1035, 0
        %v1092 = vsel %vm846, %v1039, 0
        %1094 = vmatprep.subr.bf16.mxu0 0
        %1095 = vmatpush1.bf16.msra.mxu0 %v1092
        %1096 = vmatprep.subr.bf16.mxu0 0
        %1097 = vmatpush1.bf16.msra.mxu0 0
        %1098 = vmatprep.subr.bf16.mxu0 0
        %1099 = vmatpush1.bf16.msra.mxu0 0
        %1100 = vmatprep.subr.bf16.mxu0 0
        %1101 = vmatpush1.bf16.msra.mxu0 0
        %1102 = vmatprep.subr.bf16.mxu0 0
        %1103 = vmatpush1.bf16.msra.mxu0 0
        %1104 = vmatprep.subr.bf16.mxu0 0
        %1105 = vmatpush1.bf16.msra.mxu0 0
        %1106 = vmatprep.subr.bf16.mxu0 0
        %1107 = vmatpush1.bf16.msra.mxu0 0
        %1108 = vmatprep.subr.bf16.mxu0 0
        %1109 = vmatpush1.bf16.msra.mxu0 0
        %1110 = vmatprep.subr.bf16.mxu0 0
        %1111 = vmatpush1.bf16.msra.mxu0 0
        %1112 = vmatprep.subr.bf16.mxu0 0
        %1113 = vmatpush1.bf16.msra.mxu0 0
        %1114 = vmatprep.subr.bf16.mxu0 0
        %1115 = vmatpush1.bf16.msra.mxu0 0
        %1116 = vmatprep.subr.bf16.mxu0 0
        %1117 = vmatpush1.bf16.msra.mxu0 0
        %1118 = vmatprep.subr.bf16.mxu0 0
        %1119 = vmatpush1.bf16.msra.mxu0 0
        %1120 = vmatprep.subr.bf16.mxu0 0
        %1121 = vmatpush1.bf16.msra.mxu0 0
        %1122 = vmatprep.subr.bf16.mxu0 0
        %1123 = vmatpush1.bf16.msra.mxu0 0
        %1124 = vmatprep.subr.bf16.mxu0 0
        %1125 = vmatpush1.bf16.msra.mxu0 0
        %1126 = vmatprep.mubr.bf16.mxu0 0
        %1127 = vmatmul.mubr.bf16.gmra.mrb[0].mxu0 %v1089
        %v1128 = vpop.f32.mrb[0].mxu0
        %v1129 = vadd.f32 0.0, %v1128
        %v1130 = vpop.f32.mrb[0].mxu0
        %v1131 = vpop.f32.mrb[0].mxu0
        %v1132 = vpop.f32.mrb[0].mxu0
        %1133 = vdwg.mxu0
        %v1135 = vsel %vm599, %v1036, 0
        %v1138 = vsel %vm846, %v1040, 0
        %1140 = vmatprep.subr.bf16.mxu0 0
        %1141 = vmatpush1.bf16.msra.mxu0 %v1138
        %1142 = vmatprep.subr.bf16.mxu0 0
        %1143 = vmatpush1.bf16.msra.mxu0 0
        %1144 = vmatprep.subr.bf16.mxu0 0
        %1145 = vmatpush1.bf16.msra.mxu0 0
        %1146 = vmatprep.subr.bf16.mxu0 0
        %1147 = vmatpush1.bf16.msra.mxu0 0
        %1148 = vmatprep.subr.bf16.mxu0 0
        %1149 = vmatpush1.bf16.msra.mxu0 0
        %1150 = vmatprep.subr.bf16.mxu0 0
        %1151 = vmatpush1.bf16.msra.mxu0 0
        %1152 = vmatprep.subr.bf16.mxu0 0
        %1153 = vmatpush1.bf16.msra.mxu0 0
        %1154 = vmatprep.subr.bf16.mxu0 0
        %1155 = vmatpush1.bf16.msra.mxu0 0
        %1156 = vmatprep.subr.bf16.mxu0 0
        %1157 = vmatpush1.bf16.msra.mxu0 0
        %1158 = vmatprep.subr.bf16.mxu0 0
        %1159 = vmatpush1.bf16.msra.mxu0 0
        %1160 = vmatprep.subr.bf16.mxu0 0
        %1161 = vmatpush1.bf16.msra.mxu0 0
        %1162 = vmatprep.subr.bf16.mxu0 0
        %1163 = vmatpush1.bf16.msra.mxu0 0
        %1164 = vmatprep.subr.bf16.mxu0 0
        %1165 = vmatpush1.bf16.msra.mxu0 0
        %1166 = vmatprep.subr.bf16.mxu0 0
        %1167 = vmatpush1.bf16.msra.mxu0 0
        %1168 = vmatprep.subr.bf16.mxu0 0
        %1169 = vmatpush1.bf16.msra.mxu0 0
        %1170 = vmatprep.subr.bf16.mxu0 0
        %1171 = vmatpush1.bf16.msra.mxu0 0
        %1172 = vmatprep.mubr.bf16.mxu0 0
        %1173 = vmatmul.mubr.bf16.gmra.mrb[0].mxu0 %v1135
        %v1174 = vpop.f32.mrb[0].mxu0
        %v1175 = vadd.f32 0.0, %v1174
        %v1176 = vpop.f32.mrb[0].mxu0
        %v1177 = vpop.f32.mrb[0].mxu0
        %v1178 = vpop.f32.mrb[0].mxu0
        %1179 = vdwg.mxu0
        %v1181 = vsel %vm599, %v1037, 0
        %v1184 = vsel %vm846, %v1041, 0
        %1186 = vmatprep.subr.bf16.mxu0 0
        %1187 = vmatpush1.bf16.msra.mxu0 %v1184
        %1188 = vmatprep.subr.bf16.mxu0 0
        %1189 = vmatpush1.bf16.msra.mxu0 0
        %1190 = vmatprep.subr.bf16.mxu0 0
        %1191 = vmatpush1.bf16.msra.mxu0 0
        %1192 = vmatprep.subr.bf16.mxu0 0
        %1193 = vmatpush1.bf16.msra.mxu0 0
        %1194 = vmatprep.subr.bf16.mxu0 0
        %1195 = vmatpush1.bf16.msra.mxu0 0
        %1196 = vmatprep.subr.bf16.mxu0 0
        %1197 = vmatpush1.bf16.msra.mxu0 0
        %1198 = vmatprep.subr.bf16.mxu0 0
        %1199 = vmatpush1.bf16.msra.mxu0 0
        %1200 = vmatprep.subr.bf16.mxu0 0
        %1201 = vmatpush1.bf16.msra.mxu0 0
        %1202 = vmatprep.subr.bf16.mxu0 0
        %1203 = vmatpush1.bf16.msra.mxu0 0
        %1204 = vmatprep.subr.bf16.mxu0 0
        %1205 = vmatpush1.bf16.msra.mxu0 0
        %1206 = vmatprep.subr.bf16.mxu0 0
        %1207 = vmatpush1.bf16.msra.mxu0 0
        %1208 = vmatprep.subr.bf16.mxu0 0
        %1209 = vmatpush1.bf16.msra.mxu0 0
        %1210 = vmatprep.subr.bf16.mxu0 0
        %1211 = vmatpush1.bf16.msra.mxu0 0
        %1212 = vmatprep.subr.bf16.mxu0 0
        %1213 = vmatpush1.bf16.msra.mxu0 0
        %1214 = vmatprep.subr.bf16.mxu0 0
        %1215 = vmatpush1.bf16.msra.mxu0 0
        %1216 = vmatprep.subr.bf16.mxu0 0
        %1217 = vmatpush1.bf16.msra.mxu0 0
        %1218 = vmatprep.mubr.bf16.mxu0 0
        %1219 = vmatmul.mubr.bf16.gmra.mrb[0].mxu0 %v1181
        %v1220 = vpop.f32.mrb[0].mxu0
        %v1221 = vadd.f32 0.0, %v1220
        %v1222 = vpop.f32.mrb[0].mxu0
        %v1223 = vpop.f32.mrb[0].mxu0
        %v1224 = vpop.f32.mrb[0].mxu0
        %1225 = vdwg.mxu0
        %v1226 = vsel %vm311, %v1083, 0.0
        %v1227 = vsel %vm311, %v1129, 0.0
        %v1228 = vadd.f32 %v1226, %v1227
        %v1229 = vsel %vm311, %v1175, 0.0
        %v1230 = vadd.f32 %v1228, %v1229
        %v1231 = vsel %vm311, %v1221, 0.0
        %v1232 = vadd.f32 %v1230, %v1231
        %v1233 = vlaneseq
        %v1234 = vshrl.u32 %v1233, 7
        %v1235 = vsub.s32 0, %v1234
        %v1236 = vrot.slane %v306, %v1235
        %v1237 = vadd.f32 %v1232, %v1236
        %v1238 = vadd.f32 %v1237, %v302
        %v1239 = vsel %vm311, %v1238, 0.0
        %1240 = vadd.xlane.f32.xlu0 %v1239
        %v1241 = vpop.xlane.xlu0 %1240
        %v1242 = vmul.f32 %v1241, %v315
        %v1243 = vsub.f32 %v1238, %v1242
        %v1244 = vmul.f32 %v1243, %v1243
        %v1245 = vsel %vm311, %v1244, 0.0
        %1246 = vadd.xlane.f32.xlu0 %v1245
        %v1247 = vpop.xlane.xlu0 %1246
        %v1248 = vmul.f32 %v1247, %v315
        %v1249 = vadd.f32 %v1248, 1e-05
        %v1250 = vrsqrt.pop %v1249
        %v1251 = vmul.f32 %v1243, %v1250
        %v1252 = vlaneseq
        %v1253 = vshrl.u32 %v1252, 7
        %v1254 = vsub.s32 0, %v1253
        %v1255 = vrot.slane %v307, %v1254
        %v1256 = vmul.f32 %v1251, %v1255
        %v1257 = vlaneseq
        %v1258 = vshrl.u32 %v1257, 7
        %v1259 = vsub.s32 0, %v1258
        %v1260 = vrot.slane %v308, %v1259
        %v1261 = vadd.f32 %v1256, %v1260
        %v1262 = vpack.c.bf16 %v1261, %v1261
        %v1263 = vld [vmem:[%s6] sm:$0xf]
        %v1264 = vld [vmem:[%s6 + $0x4] sm:$0xf]
        %v1265 = vld [vmem:[%s6 + $0x8] sm:$0xf]
        %v1266 = vld [vmem:[%s6 + $0xc] sm:$0xf]
        %v1267 = vlaneseq
        %v1268 = vshrl.u32 %v1267, 7
        %v1269 = vsub.s32 0, %v1268
        %v1270 = vrot.slane %v310, %v1269
        %v1275 = vunpack.c.l.b16 %v1263
        %v1276 = vunpack.c.l.b16 %v1264
        %v1277 = vunpack.c.l.b16 %v1265
        %v1278 = vunpack.c.l.b16 %v1266
        %v1279 = vpack.c.b16 %v1276, %v1275
        %v1280 = vpack.c.b16 %v1278, %v1277
        %v1284 = vsel %vm311, %v1262, 0
        %1286 = vmatprep.subr.bf16.mxu0 0
        %1287 = vmatpush1.bf16.msra.mxu0 %v1279
        %1288 = vmatprep.subr.bf16.mxu0 0
        %1289 = vmatpush1.bf16.msra.mxu0 %v1280
        %1290 = vmatprep.subr.bf16.mxu0 0
        %1291 = vmatpush1.bf16.msra.mxu0 0
        %1292 = vmatprep.subr.bf16.mxu0 0
        %1293 = vmatpush1.bf16.msra.mxu0 0
        %1294 = vmatprep.subr.bf16.mxu0 0
        %1295 = vmatpush1.bf16.msra.mxu0 0
        %1296 = vmatprep.subr.bf16.mxu0 0
        %1297 = vmatpush1.bf16.msra.mxu0 0
        %1298 = vmatprep.subr.bf16.mxu0 0
        %1299 = vmatpush1.bf16.msra.mxu0 0
        %1300 = vmatprep.subr.bf16.mxu0 0
        %1301 = vmatpush1.bf16.msra.mxu0 0
        %1302 = vmatprep.subr.bf16.mxu0 0
        %1303 = vmatpush1.bf16.msra.mxu0 0
        %1304 = vmatprep.subr.bf16.mxu0 0
        %1305 = vmatpush1.bf16.msra.mxu0 0
        %1306 = vmatprep.subr.bf16.mxu0 0
        %1307 = vmatpush1.bf16.msra.mxu0 0
        %1308 = vmatprep.subr.bf16.mxu0 0
        %1309 = vmatpush1.bf16.msra.mxu0 0
        %1310 = vmatprep.subr.bf16.mxu0 0
        %1311 = vmatpush1.bf16.msra.mxu0 0
        %1312 = vmatprep.subr.bf16.mxu0 0
        %1313 = vmatpush1.bf16.msra.mxu0 0
        %1314 = vmatprep.subr.bf16.mxu0 0
        %1315 = vmatpush1.bf16.msra.mxu0 0
        %1316 = vmatprep.subr.bf16.mxu0 0
        %1317 = vmatpush1.bf16.msra.mxu0 0
        %1318 = vmatprep.mubr.bf16.mxu0 0
        %1319 = vmatmul.mubr.bf16.gmra.mrb[0].mxu0 %v1284
        %v1320 = vpop.f32.mrb[0].mxu0
        %v1321 = vadd.f32 %v1270, %v1320
        %v1322 = vpop.f32.mrb[0].mxu0
        %v1323 = vpop.f32.mrb[0].mxu0
        %v1324 = vpop.f32.mrb[0].mxu0
        %1325 = vdwg.mxu0
        %v1326 = vmax.f32 %v1321, 0.0
        %v1327 = vpack.c.bf16 %v1326, %v1326
        %v1328 = vld [vmem:[%s7] sm:$0xf]
        %v1329 = vld [vmem:[%s7 + $0x4] sm:$0xf]
        %v1330 = vld [vmem:[%s7 + $0x8] sm:$0xf]
        %v1331 = vld [vmem:[%s7 + $0xc] sm:$0xf]
        %v1332 = vld [vmem:[%s7 + $0x10] sm:$0xf]
        %v1333 = vld [vmem:[%s7 + $0x14] sm:$0xf]
        %v1334 = vld [vmem:[%s7 + $0x18] sm:$0xf]
        %v1335 = vld [vmem:[%s7 + $0x1c] sm:$0xf]
        %v1336 = vld [vmem:[%s7 + $0x20] sm:$0xf]
        %v1337 = vld [vmem:[%s7 + $0x24] sm:$0xf]
        %v1338 = vld [vmem:[%s7 + $0x28] sm:$0xf]
        %v1339 = vld [vmem:[%s7 + $0x2c] sm:$0xf]
        %v1340 = vld [vmem:[%s7 + $0x30] sm:$0xf]
        %v1341 = vld [vmem:[%s7 + $0x34] sm:$0xf]
        %v1342 = vld [vmem:[%s7 + $0x38] sm:$0xf]
        %v1343 = vld [vmem:[%s7 + $0x3c] sm:$0xf]
        %v1344 = vlaneseq
        %v1345 = vshrl.u32 %v1344, 7
        %v1346 = vsub.s32 0, %v1345
        %v1347 = vrot.slane %v309, %v1346
        %v1364 = vunpack.c.l.b16 %v1328
        %v1365 = vunpack.c.l.b16 %v1329
        %v1366 = vunpack.c.l.b16 %v1330
        %v1367 = vunpack.c.l.b16 %v1331
        %v1368 = vunpack.c.l.b16 %v1332
        %v1369 = vunpack.c.l.b16 %v1333
        %v1370 = vunpack.c.l.b16 %v1334
        %v1371 = vunpack.c.l.b16 %v1335
        %v1372 = vunpack.c.l.b16 %v1336
        %v1373 = vunpack.c.l.b16 %v1337
        %v1374 = vunpack.c.l.b16 %v1338
        %v1375 = vunpack.c.l.b16 %v1339
        %v1376 = vunpack.c.l.b16 %v1340
        %v1377 = vunpack.c.l.b16 %v1341
        %v1378 = vunpack.c.l.b16 %v1342
        %v1379 = vunpack.c.l.b16 %v1343
        %v1380 = vpack.c.b16 %v1365, %v1364
        %v1381 = vpack.c.b16 %v1367, %v1366
        %v1382 = vpack.c.b16 %v1369, %v1368
        %v1383 = vpack.c.b16 %v1371, %v1370
        %v1384 = vpack.c.b16 %v1373, %v1372
        %v1385 = vpack.c.b16 %v1375, %v1374
        %v1386 = vpack.c.b16 %v1377, %v1376
        %v1387 = vpack.c.b16 %v1379, %v1378
        %1396 = vmatprep.subr.bf16.mxu0 0
        %1397 = vmatpush1.bf16.msra.mxu0 %v1380
        %1398 = vmatprep.subr.bf16.mxu0 0
        %1399 = vmatpush1.bf16.msra.mxu0 %v1381
        %1400 = vmatprep.subr.bf16.mxu0 0
        %1401 = vmatpush1.bf16.msra.mxu0 %v1382
        %1402 = vmatprep.subr.bf16.mxu0 0
        %1403 = vmatpush1.bf16.msra.mxu0 %v1383
        %1404 = vmatprep.subr.bf16.mxu0 0
        %1405 = vmatpush1.bf16.msra.mxu0 %v1384
        %1406 = vmatprep.subr.bf16.mxu0 0
        %1407 = vmatpush1.bf16.msra.mxu0 %v1385
        %1408 = vmatprep.subr.bf16.mxu0 0
        %1409 = vmatpush1.bf16.msra.mxu0 %v1386
        %1410 = vmatprep.subr.bf16.mxu0 0
        %1411 = vmatpush1.bf16.msra.mxu0 %v1387
        %1412 = vmatprep.subr.bf16.mxu0 0
        %1413 = vmatpush1.bf16.msra.mxu0 0
        %1414 = vmatprep.subr.bf16.mxu0 0
        %1415 = vmatpush1.bf16.msra.mxu0 0
        %1416 = vmatprep.subr.bf16.mxu0 0
        %1417 = vmatpush1.bf16.msra.mxu0 0
        %1418 = vmatprep.subr.bf16.mxu0 0
        %1419 = vmatpush1.bf16.msra.mxu0 0
        %1420 = vmatprep.subr.bf16.mxu0 0
        %1421 = vmatpush1.bf16.msra.mxu0 0
        %1422 = vmatprep.subr.bf16.mxu0 0
        %1423 = vmatpush1.bf16.msra.mxu0 0
        %1424 = vmatprep.subr.bf16.mxu0 0
        %1425 = vmatpush1.bf16.msra.mxu0 0
        %1426 = vmatprep.subr.bf16.mxu0 0
        %1427 = vmatpush1.bf16.msra.mxu0 0
        %1428 = vmatprep.mubr.bf16.mxu0 0
        %1429 = vmatmul.mubr.bf16.gmra.mrb[0].mxu0 %v1327
        %v1430 = vpop.f32.mrb[0].mxu0
        %v1431 = vadd.f32 %v1347, %v1430
        %v1432 = vpop.f32.mrb[0].mxu0
        %v1433 = vpop.f32.mrb[0].mxu0
        %v1434 = vpop.f32.mrb[0].mxu0
        %1435 = vdwg.mxu0
        %v1436 = vadd.f32 %v1431, %v1238
        %1437 = vst.msk [vmem:[%s296] sm:$0xff] %vm311, %v1436
        %s1438 = sand.u32 %s203, 1
        %s1439 = scalar_lea.sflag [#allocation3], %s1438
        %s1440 = sand.u32 %s203, 1
        %s1441 = smul.addr %s1440, 8
        %s1442 = scalar_lea.vmem [#allocation2], %s1441
        // Predicated region
        $region53: #{tpu_custom_call.1} parent=51 // pred_check
          %p1443 = pneg %p213
        $region54: #{tpu_custom_call.1} parent=51 // pred_check_branch
          %1445 = sbr.rel (%p1443) target = $region56
        $region55: #{tpu_custom_call.1} parent=51 // pred_region
          %s1447 = ssub.s32 128, 128
          %1448 = vsyncadd %s1439, %s1447
          %s1449 = smul.addr %s22, 128
          %s1450 = scalar_lea.hbm %s8, %s1449
          %s1452 = sshll.u32 %s1442, 4
          %s1453 = int_to_ptr.vmem [resolvable:$true] %s1452
          %1455 = dma.vmem_to_hbm [thread:$0]  %s1453, 128, %s1450, %s1439
        $region56: #{tpu_custom_call.1} parent=51 // pred_fallthru
          _
      $region52: #{tpu_custom_call.1} parent=5 // pred_fallthru
        _
      %p1456 = scmp.le.s32.totalorder 2, %s17
      // Predicated region
      $region57: #{tpu_custom_call.1} parent=5 // pred_check
        %p1457 = pneg %p1456
      $region58: #{tpu_custom_call.1} parent=5 // pred_check_branch
        %1459 = sbr.rel (%p1457) target = $region60
      $region59: #{tpu_custom_call.1} parent=5 // pred_region
        %s1460 = ssub.s32 %s17, 2
        // Predicated region
        $region61: #{tpu_custom_call.1} parent=59 // pred_check
          %p1461 = pneg %p219
        $region62: #{tpu_custom_call.1} parent=59 // pred_check_branch
          %1463 = sbr.rel (%p1461) target = $region64
        $region63: #{tpu_custom_call.1} parent=59 // pred_region
          %s1464 = sand.u32 %s204, 1
          %s1465 = scalar_lea.sflag [#allocation3], %s1464
          %s1466 = sand.u32 %s204, 1
          %s1467 = smul.addr %s1466, 8
          %s1468 = scalar_lea.vmem [#allocation2], %s1467
          %1469 = dma.done %s1465, 128
        $region64: #{tpu_custom_call.1} parent=59 // pred_fallthru
          _
      $region60: #{tpu_custom_call.1} parent=5 // pred_fallthru
        _
    $region6: #{tpu_custom_call.1} parent=1 // loop_footer
      %s21 = sadd.s32 1, %s17
    $region7: #{tpu_custom_call.1} parent=1 // loop_footer_branch
      %16 = sbr.rel target = $region3
    $region8: #{tpu_custom_call.1} parent=1 // loop_exit
      _
    %1470 = vsyncpa [#allocation3], 1
    %s1471 = scalar_lea.sflag [#allocation3], 1
    %1472 = vsyncpa %s1471, 1

</llo_original>
